<compile_context>
chip_gen: v5e
topology: v5e:2x2
jax: 0.10.0
libtpu: 0.0.40
codegen_flags: <defaults>
</compile_context>

<pallas_src>
import functools

import jax
import jax.numpy as jnp
from jax.experimental import pallas as pl
from jax.experimental.pallas import tpu as pltpu


NEG_INF = -1e30  # finite: avoids 0/0 NaN in softmax when a length is 0


def _round_up(x, m):
    return ((x + m - 1) // m) * m


def _pick_batch_block(batch, requested):
    """Pick the batch-block size: multiple of 8 (sublane tile), keep >= 2 grid
    steps when the batch permits (v7x megacore), pad batch to a multiple."""
    bb = max(8, (int(requested) // 8) * 8)
    b_pad8 = _round_up(max(int(batch), 1), 8)
    bb = min(bb, b_pad8)
    if b_pad8 // bb < 2 and b_pad8 >= 16:      # leave >= 2 steps for 2 TCs
        bb = max(8, ((b_pad8 // 2) // 8) * 8)
    b_pad = _round_up(max(int(batch), 1), bb)
    return bb, b_pad


# ----------------------------------------------------------------------------
# Fused encoder + attention-decoder kernel (one batch block per grid step)
# ----------------------------------------------------------------------------
def _nmt_fused_kernel(bias_ref, src_emb_ref, tgt_emb_ref,
                      w_enc_ref, b_enc_ref, w_qin_ref, w_ctx_ref, b_dec_ref,
                      out_ref, attn_ref):
    # Block shapes:
    #   bias_ref    : [BB, S_pad]      f32   (0 for valid src pos, -1e30 pad)
    #   src_emb_ref : [BB*S_pad, E]    bf16  (rows in (batch, src_pos) order)
    #   tgt_emb_ref : [BB*T, E]        bf16  (rows in (batch, tgt_pos) order)
    #   w_enc [E,H], w_qin [E,2H], w_ctx [H,H] bf16; biases [1,H] f32
    #   out_ref     : [BB, T, H]       (batch-major; wrapper transposes once)
    #   attn_ref    : [BB, T, S_pad]
    BB, T, H = out_ref.shape
    S = attn_ref.shape[2]

    # ---- encoder stand-in: memory_bank = tanh(src_emb @ W_enc + b_enc) ----
    # One MXU pass over all BB*S_pad rows; cast to bf16 immediately so no f32
    # copy of the memory bank stays live across the attention block.
    mem = jnp.tanh(
        jnp.dot(src_emb_ref[...], w_enc_ref[...],
                preferred_element_type=jnp.float32)
        + b_enc_ref[...]).astype(jnp.bfloat16).reshape(BB, S, H)

    # ---- decoder stand-in: global attention over memory_bank --------------
    # Single fused [E, 2H] projection (N=256 fills the 256-wide MXUs on
    # v6e/v7x and halves weight pushes on v5e); slices are lane-aligned.
    qin = jnp.dot(tgt_emb_ref[...], w_qin_ref[...],
                  preferred_element_type=jnp.float32)          # [BB*T, 2H] f32
    q = qin[:, :H].astype(jnp.bfloat16).reshape(BB, T, H)      # attention query

    # scores: batched dot_general contracting H (no memory-bank transpose);
    # with S padded to 128 lanes the result / softmax / store are lane-dense.
    scores = jnp.einsum("bth,bsh->bts", q, mem,
                        preferred_element_type=jnp.float32)    # [BB, T, S]

    # src-padding mask as a precomputed additive bias (broadcast over T).
    scores = scores + bias_ref[...][:, None, :]

    # softmax over S (exp + approx reciprocal both ride the EUP slot, f32).
    scores = scores - jnp.max(scores, axis=-1, keepdims=True)
    p = jnp.exp(scores)
    attn = p * pl.reciprocal(jnp.sum(p, axis=-1, keepdims=True), approx=True)

    ctx = jnp.einsum("bts,bsh->bth", attn.astype(jnp.bfloat16), mem,
                     preferred_element_type=jnp.float32)       # [BB, T, H]
    dec = jnp.tanh(
        qin[:, H:]                                             # input-feed half
        + jnp.dot(ctx.reshape(BB * T, H).astype(jnp.bfloat16), w_ctx_ref[...],
                  preferred_element_type=jnp.float32)
        + b_dec_ref[...])                                      # [BB*T, H] f32

    # batch-major, block-contiguous stores (lane-dense H / S_pad last dims).
    out_ref[...] = dec.reshape(BB, T, H).astype(out_ref.dtype)
    attn_ref[...] = attn.astype(attn_ref.dtype)


# ----------------------------------------------------------------------------
# NMTModel.forward
# ----------------------------------------------------------------------------
def nmt_forward(params, src, tgt, lengths, dec_state=None, multigpu=False,
                batch_block=64, out_dtype=jnp.float32):
    """src: [src_len, batch, 1] int ids, tgt: [tgt_len, batch] int ids,
    lengths: [batch].  Returns (decoder_outputs, attns, dec_state)."""
    del dec_state  # TODO(synk): initial DecoderState unused by stand-in decoder
    tgt = tgt[:-1]                                  # exactly as NMTModel.forward
    S, B = int(src.shape[0]), int(src.shape[1])
    T = int(tgt.shape[0])
    E = params["enc_embed"].shape[1]
    H = params["w_enc"].shape[1]
    H2 = params["w_qin"].shape[1]                   # = 2*H (fused q || input-feed)

    BB, B_pad = _pick_batch_block(B, batch_block)
    S_pad = _round_up(S, 128)                       # lane-dense attention axis

    # ---- wrapper glue: pad, gather embeddings, build additive mask bias ----
    # TODO(synk): at large B*(S+T)*E the embedding gathers could be fused into
    # the kernel (scalar-prefetched ids + manual DMA); at these sizes it's noise.
    src_ids = src[:, :, 0].astype(jnp.int32)        # [S, B]
    tgt_ids = tgt.astype(jnp.int32)                 # [T, B]
    lens = lengths.astype(jnp.int32)                # [B]
    if S_pad > S:
        src_ids = jnp.pad(src_ids, ((0, S_pad - S), (0, 0)))
    if B_pad > B:
        src_ids = jnp.pad(src_ids, ((0, 0), (0, B_pad - B)))
        tgt_ids = jnp.pad(tgt_ids, ((0, 0), (0, B_pad - B)))
        lens = jnp.pad(lens, (0, B_pad - B))        # padded rows: length 0

    src_emb2 = params["enc_embed"][src_ids.T.reshape(-1)]   # [B_pad*S_pad, E] bf16
    tgt_emb2 = params["dec_embed"][tgt_ids.T.reshape(-1)]   # [B_pad*T, E]    bf16
    bias = jnp.where(
        jax.lax.broadcasted_iota(jnp.int32, (B_pad, S_pad), 1) < lens[:, None],
        jnp.float32(0.0), jnp.float32(NEG_INF))              # [B_pad, S_pad]

    # Rough per-step VMEM footprint (double-buffered I/O + f32 intermediates),
    # used for an explicit scoped-VMEM limit (v7x has only 64 MiB physical).
    d_out = jnp.dtype(out_dtype).itemsize
    vmem_est = (
        2 * (BB * S_pad * E * 2 + BB * T * E * 2 + BB * S_pad * 4)
        + 2 * (BB * T * H * d_out + BB * T * S_pad * d_out)
        + 2 * ((E * H + E * H2 + H * H) * 2 + 2 * H * 4)
        + 4 * BB * (6 * S_pad * H + T * (2 * H2 + 4 * S_pad + 4 * H)))
    vmem_limit = int(min(max(2 * vmem_est, 16 * 2**20), 48 * 2**20))

    dec_bth, attn_bts = pl.pallas_call(
        _nmt_fused_kernel,
        grid=(B_pad // BB,),
        in_specs=[
            pl.BlockSpec((BB, S_pad), lambda b: (b, 0)),          # mask bias
            pl.BlockSpec((BB * S_pad, E), lambda b: (b, 0)),      # src embeddings
            pl.BlockSpec((BB * T, E), lambda b: (b, 0)),          # tgt embeddings
            pl.BlockSpec((E, H), lambda b: (0, 0)),               # w_enc
            pl.BlockSpec((1, H), lambda b: (0, 0)),               # b_enc
            pl.BlockSpec((E, H2), lambda b: (0, 0)),              # w_q || w_in
            pl.BlockSpec((H, H), lambda b: (0, 0)),               # w_ctx
            pl.BlockSpec((1, H), lambda b: (0, 0)),               # b_dec
        ],
        out_specs=(
            pl.BlockSpec((BB, T, H), lambda b: (b, 0, 0)),        # decoder outputs
            pl.BlockSpec((BB, T, S_pad), lambda b: (b, 0, 0)),    # attention
        ),
        out_shape=(
            jax.ShapeDtypeStruct((B_pad, T, H), out_dtype),
            jax.ShapeDtypeStruct((B_pad, T, S_pad), out_dtype),
        ),
        compiler_params=pltpu.CompilerParams(
            dimension_semantics=("parallel",),
            vmem_limit_bytes=vmem_limit),
    )(bias, src_emb2, tgt_emb2,
      params["w_enc"], params["b_enc"].reshape(1, H),
      params["w_qin"], params["w_ctx"], params["b_dec"].reshape(1, H))

    # Single wrapper-side layout transpose (XLA plumbing, fusable downstream)
    # instead of per-grid-step in-kernel transposes; drop batch / src padding.
    dec_out = jnp.transpose(dec_bth[:B], (1, 0, 2))               # [T, B, H]
    attn = jnp.transpose(attn_bts[:B, :, :S], (1, 0, 2))          # [T, B, S]

    attns = {"std": attn}
    # TODO(synk): dec_state is the last decoder *output*, not an RNN hidden
    # state, because the decoder here is a stateless attention stand-in.
    dec_state_out = dec_out[-1]
    if multigpu:
        return dec_out, None, None
    return dec_out, attns, dec_state_out


# ----------------------------------------------------------------------------
# Pure-JAX reference (f32) for a numerical sanity check
# ----------------------------------------------------------------------------
def nmt_forward_ref(params, src, tgt, lengths):
    tgt = tgt[:-1]
    f32 = jnp.float32
    H = params["w_enc"].shape[1]
    w_q = params["w_qin"][:, :H].astype(f32)
    w_in = params["w_qin"][:, H:].astype(f32)
    src_emb = params["enc_embed"].astype(f32)[src[:, :, 0]]          # [S,B,E]
    mem = jnp.tanh(jnp.einsum("sbe,eh->sbh", src_emb,
                              params["w_enc"].astype(f32)) + params["b_enc"])
    tgt_emb = params["dec_embed"].astype(f32)[tgt]                   # [T,B,E]
    q = jnp.einsum("tbe,eh->tbh", tgt_emb, w_q)
    inp = jnp.einsum("tbe,eh->tbh", tgt_emb, w_in)
    scores = jnp.einsum("tbh,sbh->tbs", q, mem)
    mask = jnp.arange(mem.shape[0])[None, None, :] < lengths[None, :, None]
    scores = jnp.where(mask, scores, NEG_INF)
    scores = scores - scores.max(-1, keepdims=True)
    p = jnp.exp(scores)
    attn = p / p.sum(-1, keepdims=True)
    ctx = jnp.einsum("tbs,sbh->tbh", attn, mem)
    dec = jnp.tanh(inp + jnp.einsum("tbh,hk->tbk", ctx,
                                    params["w_ctx"].astype(f32))
                   + params["b_dec"])
    return dec, attn, dec[-1]


def init_params(key, vocab, E, H):
    ks = jax.random.split(key, 6)
    s = 0.1
    f = lambda k, shape: s * jax.random.normal(k, shape, jnp.float32)
    return {
        # bf16 storage for MXU operands (f32 accumulation in-kernel);
        # biases stay f32 so elementwise math is f32 (v5e-friendly).
        "enc_embed": f(ks[0], (vocab, E)).astype(jnp.bfloat16),
        "dec_embed": f(ks[1], (vocab, E)).astype(jnp.bfloat16),
        "w_enc":     f(ks[2], (E, H)).astype(jnp.bfloat16),
        "b_enc":     f(ks[3], (H,)),
        # Fused decoder projection: columns [0:H] = attention-query weights,
        # [H:2H] = input-feed weights (one N=2H MXU pass in-kernel).
        "w_qin":     f(ks[4], (E, 2 * H)).astype(jnp.bfloat16),
        "w_ctx":     f(ks[5], (H, H)).astype(jnp.bfloat16),
        "b_dec":     jnp.zeros((H,), jnp.float32),
    }


if __name__ == "__main__":
    # T = TGT_LEN - 1 = 8; B=16 gives BB=8 and a 2-step grid (exercises both
    # v7x TensorCores via dimension_semantics=("parallel",)).
    B, S_LEN, TGT_LEN, E, H, V = 16, 16, 9, 128, 128, 32

    key = jax.random.PRNGKey(0)
    kp, ks, kt, kl = jax.random.split(key, 4)
    params = init_params(kp, V, E, H)

    src = jax.random.randint(ks, (S_LEN, B, 1), 0, V, dtype=jnp.int32)
    tgt = jax.random.randint(kt, (TGT_LEN, B), 0, V, dtype=jnp.int32)
    lengths = jax.random.randint(kl, (B,), 1, S_LEN + 1, dtype=jnp.int32)

    fwd = jax.jit(functools.partial(nmt_forward, batch_block=64))
    dec_out, attns, dec_state = fwd(params, src, tgt, lengths)
    jax.block_until_ready((dec_out, attns["std"], dec_state))

    T = TGT_LEN - 1
    assert dec_out.shape == (T, B, H), dec_out.shape
    assert attns["std"].shape == (T, B, S_LEN), attns["std"].shape
    assert dec_state.shape == (B, H), dec_state.shape
    assert bool(jnp.all(jnp.isfinite(dec_out)))

    ref_out, ref_attn, _ = nmt_forward_ref(params, src, tgt, lengths)
    assert float(jnp.max(jnp.abs(dec_out - ref_out))) < 5e-2
    assert float(jnp.max(jnp.abs(attns["std"] - ref_attn))) < 5e-2
    print("KERNEL_OK")
</pallas_src>

<mosaic_0001>
module attributes {stable_mosaic.version = 11 : i64} {
  func.func @_nmt_fused_kernel(%arg0: i32, %arg1: memref<8x128xf32, #tpu.memory_space<vmem>>, %arg2: memref<1024x128xbf16, #tpu.memory_space<vmem>>, %arg3: memref<64x128xbf16, #tpu.memory_space<vmem>>, %arg4: memref<128x128xbf16, #tpu.memory_space<vmem>>, %arg5: memref<1x128xf32, #tpu.memory_space<vmem>>, %arg6: memref<128x256xbf16, #tpu.memory_space<vmem>>, %arg7: memref<128x128xbf16, #tpu.memory_space<vmem>>, %arg8: memref<1x128xf32, #tpu.memory_space<vmem>>, %arg9: memref<8x8x128xf32, #tpu.memory_space<vmem>>, %arg10: memref<8x8x128xf32, #tpu.memory_space<vmem>>) attributes {dimension_semantics = [#tpu.dimension_semantics<parallel>], iteration_bounds = array<i64: 2>, scalar_prefetch = 0 : i64, scratch_operands = 0 : i64, tpu.core_type = #tpu.core_type<tc>, window_params = [{transform_indices = @transform_0, window_bounds = array<i64: 8, 128>}, {transform_indices = @transform_1, window_bounds = array<i64: 1024, 128>}, {transform_indices = @transform_2, window_bounds = array<i64: 64, 128>}, {pipeline_mode = #tpu.pipeline_mode<synchronous>, transform_indices = @transform_3, window_bounds = array<i64: 128, 128>}, {pipeline_mode = #tpu.pipeline_mode<synchronous>, transform_indices = @transform_4, window_bounds = array<i64: 1, 128>}, {pipeline_mode = #tpu.pipeline_mode<synchronous>, transform_indices = @transform_5, window_bounds = array<i64: 128, 256>}, {pipeline_mode = #tpu.pipeline_mode<synchronous>, transform_indices = @transform_6, window_bounds = array<i64: 128, 128>}, {pipeline_mode = #tpu.pipeline_mode<synchronous>, transform_indices = @transform_7, window_bounds = array<i64: 1, 128>}, {transform_indices = @transform_8, window_bounds = array<i64: 8, 8, 128>}, {transform_indices = @transform_9, window_bounds = array<i64: 8, 8, 128>}]} {
    %c0 = arith.constant 0 : index
    %c0_0 = arith.constant 0 : index
    %0 = vector.load %arg2[%c0, %c0_0] : memref<1024x128xbf16, #tpu.memory_space<vmem>>, vector<1024x128xbf16>
    %c0_1 = arith.constant 0 : index
    %c0_2 = arith.constant 0 : index
    %1 = vector.load %arg4[%c0_1, %c0_2] : memref<128x128xbf16, #tpu.memory_space<vmem>>, vector<128x128xbf16>
    %cst = arith.constant dense<0.000000e+00> : vector<1024x128xf32>
    %2 = tpu.matmul %0, %1, %cst {dimension_numbers = #tpu.dot_dimension_numbers<[1], [0], [0], [1], [0, 0, 1, 1], [], []>} : vector<1024x128xbf16>, vector<128x128xbf16>, vector<1024x128xf32> -> vector<1024x128xf32>
    %c0_3 = arith.constant 0 : index
    %c0_4 = arith.constant 0 : index
    %3 = vector.load %arg5[%c0_3, %c0_4] : memref<1x128xf32, #tpu.memory_space<vmem>>, vector<1x128xf32>
    %4 = vector.broadcast %3 : vector<1x128xf32> to vector<1024x128xf32>
    %5 = arith.addf %2, %4 : vector<1024x128xf32>
    %6 = math.tanh %5 : vector<1024x128xf32>
    %7 = arith.truncf %6 : vector<1024x128xf32> to vector<1024x128xbf16>
    %8 = vector.shape_cast %7 : vector<1024x128xbf16> to vector<8x128x128xbf16>
    %c0_5 = arith.constant 0 : index
    %c0_6 = arith.constant 0 : index
    %9 = vector.load %arg3[%c0_5, %c0_6] : memref<64x128xbf16, #tpu.memory_space<vmem>>, vector<64x128xbf16>
    %c0_7 = arith.constant 0 : index
    %c0_8 = arith.constant 0 : index
    %10 = vector.load %arg6[%c0_7, %c0_8] : memref<128x256xbf16, #tpu.memory_space<vmem>>, vector<128x256xbf16>
    %cst_9 = arith.constant dense<0.000000e+00> : vector<64x256xf32>
    %11 = tpu.matmul %9, %10, %cst_9 {dimension_numbers = #tpu.dot_dimension_numbers<[1], [0], [0], [1], [0, 0, 1, 1], [], []>} : vector<64x128xbf16>, vector<128x256xbf16>, vector<64x256xf32> -> vector<64x256xf32>
    %12 = vector.extract_strided_slice %11 {offsets = [0, 0], sizes = [64, 128], strides = [1, 1]} : vector<64x256xf32> to vector<64x128xf32>
    %13 = arith.truncf %12 : vector<64x128xf32> to vector<64x128xbf16>
    %14 = vector.shape_cast %13 : vector<64x128xbf16> to vector<8x8x128xbf16>
    "tpu.trace_start"() <{level = 10 : i32, message = "bth,bsh->bts"}> : () -> ()
    %cst_10 = arith.constant dense<0.000000e+00> : vector<8x8x128xf32>
    %15 = tpu.matmul %14, %8, %cst_10 {dimension_numbers = #tpu.dot_dimension_numbers<[2], [2], [1], [1], [0, 0, 0, 1, 1, 1], [0], [0]>} : vector<8x8x128xbf16>, vector<8x128x128xbf16>, vector<8x8x128xf32> -> vector<8x8x128xf32>
    "tpu.trace_stop"() : () -> ()
    %c0_11 = arith.constant 0 : index
    %c0_12 = arith.constant 0 : index
    %16 = vector.load %arg1[%c0_11, %c0_12] : memref<8x128xf32, #tpu.memory_space<vmem>>, vector<8x128xf32>
    %17 = vector.shape_cast %16 : vector<8x128xf32> to vector<8x1x128xf32>
    %18 = vector.broadcast %17 : vector<8x1x128xf32> to vector<8x8x128xf32>
    %19 = arith.addf %15, %18 : vector<8x8x128xf32>
    %cst_13 = arith.constant dense<0xFF800000> : vector<8x8xf32>
    %20 = vector.multi_reduction <maximumf>, %19, %cst_13 [2] : vector<8x8x128xf32> to vector<8x8xf32>
    %21 = vector.shape_cast %20 : vector<8x8xf32> to vector<8x8x1xf32>
    %22 = vector.broadcast %21 : vector<8x8x1xf32> to vector<8x8x128xf32>
    %23 = arith.subf %19, %22 : vector<8x8x128xf32>
    %24 = math.exp %23 : vector<8x8x128xf32>
    %cst_14 = arith.constant dense<0.000000e+00> : vector<8x8xf32>
    %25 = vector.multi_reduction <add>, %24, %cst_14 [2] : vector<8x8x128xf32> to vector<8x8xf32>
    %26 = vector.shape_cast %25 : vector<8x8xf32> to vector<8x8x1xf32>
    %27 = tpu.reciprocal %26 {approx = true} : vector<8x8x1xf32> -> vector<8x8x1xf32>
    %28 = vector.broadcast %27 : vector<8x8x1xf32> to vector<8x8x128xf32>
    %29 = arith.mulf %24, %28 : vector<8x8x128xf32>
    %30 = arith.truncf %29 : vector<8x8x128xf32> to vector<8x8x128xbf16>
    "tpu.trace_start"() <{level = 10 : i32, message = "bts,bsh->bth"}> : () -> ()
    %cst_15 = arith.constant dense<0.000000e+00> : vector<8x8x128xf32>
    %31 = tpu.matmul %30, %8, %cst_15 {dimension_numbers = #tpu.dot_dimension_numbers<[2], [1], [1], [2], [0, 0, 0, 1, 1, 2], [0], [0]>} : vector<8x8x128xbf16>, vector<8x128x128xbf16>, vector<8x8x128xf32> -> vector<8x8x128xf32>
    "tpu.trace_stop"() : () -> ()
    %32 = vector.extract_strided_slice %11 {offsets = [0, 128], sizes = [64, 128], strides = [1, 1]} : vector<64x256xf32> to vector<64x128xf32>
    %33 = vector.shape_cast %31 : vector<8x8x128xf32> to vector<64x128xf32>
    %34 = arith.truncf %33 : vector<64x128xf32> to vector<64x128xbf16>
    %c0_16 = arith.constant 0 : index
    %c0_17 = arith.constant 0 : index
    %35 = vector.load %arg7[%c0_16, %c0_17] : memref<128x128xbf16, #tpu.memory_space<vmem>>, vector<128x128xbf16>
    %cst_18 = arith.constant dense<0.000000e+00> : vector<64x128xf32>
    %36 = tpu.matmul %34, %35, %cst_18 {dimension_numbers = #tpu.dot_dimension_numbers<[1], [0], [0], [1], [0, 0, 1, 1], [], []>} : vector<64x128xbf16>, vector<128x128xbf16>, vector<64x128xf32> -> vector<64x128xf32>
    %37 = arith.addf %32, %36 : vector<64x128xf32>
    %c0_19 = arith.constant 0 : index
    %c0_20 = arith.constant 0 : index
    %38 = vector.load %arg8[%c0_19, %c0_20] : memref<1x128xf32, #tpu.memory_space<vmem>>, vector<1x128xf32>
    %39 = vector.broadcast %38 : vector<1x128xf32> to vector<64x128xf32>
    %40 = arith.addf %37, %39 : vector<64x128xf32>
    %41 = math.tanh %40 : vector<64x128xf32>
    %42 = vector.shape_cast %41 : vector<64x128xf32> to vector<8x8x128xf32>
    %c0_21 = arith.constant 0 : index
    %c0_22 = arith.constant 0 : index
    %c0_23 = arith.constant 0 : index
    %43 = vector.load %arg9[%c0_21, %c0_22, %c0_23] : memref<8x8x128xf32, #tpu.memory_space<vmem>>, vector<8x8x128xf32>
    tpu.vector_store %arg9[%c0_21, %c0_22, %c0_23], %42 {strides = array<i32>} : memref<8x8x128xf32, #tpu.memory_space<vmem>>, vector<8x8x128xf32>,
    %c0_24 = arith.constant 0 : index
    %c0_25 = arith.constant 0 : index
    %c0_26 = arith.constant 0 : index
    %44 = vector.load %arg10[%c0_24, %c0_25, %c0_26] : memref<8x8x128xf32, #tpu.memory_space<vmem>>, vector<8x8x128xf32>
    tpu.vector_store %arg10[%c0_24, %c0_25, %c0_26], %29 {strides = array<i32>} : memref<8x8x128xf32, #tpu.memory_space<vmem>>, vector<8x8x128xf32>,
    return
  }
  func.func @transform_0(%arg0: i32) -> (i32, i32) {
    %c0_i32 = arith.constant 0 : i32
    %c0_i32_0 = arith.constant 0 : i32
    return %arg0, %c0_i32 : i32, i32
  }
  func.func @transform_1(%arg0: i32) -> (i32, i32) {
    %c0_i32 = arith.constant 0 : i32
    %c0_i32_0 = arith.constant 0 : i32
    return %arg0, %c0_i32 : i32, i32
  }
  func.func @transform_2(%arg0: i32) -> (i32, i32) {
    %c0_i32 = arith.constant 0 : i32
    %c0_i32_0 = arith.constant 0 : i32
    return %arg0, %c0_i32 : i32, i32
  }
  func.func @transform_3(%arg0: i32) -> (i32, i32) {
    %c0_i32 = arith.constant 0 : i32
    %c0_i32_0 = arith.constant 0 : i32
    %c0_i32_1 = arith.constant 0 : i32
    return %c0_i32, %c0_i32_0 : i32, i32
  }
  func.func @transform_4(%arg0: i32) -> (i32, i32) {
    %c0_i32 = arith.constant 0 : i32
    %c0_i32_0 = arith.constant 0 : i32
    %c0_i32_1 = arith.constant 0 : i32
    return %c0_i32, %c0_i32_0 : i32, i32
  }
  func.func @transform_5(%arg0: i32) -> (i32, i32) {
    %c0_i32 = arith.constant 0 : i32
    %c0_i32_0 = arith.constant 0 : i32
    %c0_i32_1 = arith.constant 0 : i32
    return %c0_i32, %c0_i32_0 : i32, i32
  }
  func.func @transform_6(%arg0: i32) -> (i32, i32) {
    %c0_i32 = arith.constant 0 : i32
    %c0_i32_0 = arith.constant 0 : i32
    %c0_i32_1 = arith.constant 0 : i32
    return %c0_i32, %c0_i32_0 : i32, i32
  }
  func.func @transform_7(%arg0: i32) -> (i32, i32) {
    %c0_i32 = arith.constant 0 : i32
    %c0_i32_0 = arith.constant 0 : i32
    %c0_i32_1 = arith.constant 0 : i32
    return %c0_i32, %c0_i32_0 : i32, i32
  }
  func.func @transform_8(%arg0: i32) -> (i32, i32, i32) {
    %c0_i32 = arith.constant 0 : i32
    %c0_i32_0 = arith.constant 0 : i32
    %c0_i32_1 = arith.constant 0 : i32
    return %arg0, %c0_i32, %c0_i32_0 : i32, i32, i32
  }
  func.func @transform_9(%arg0: i32) -> (i32, i32, i32) {
    %c0_i32 = arith.constant 0 : i32
    %c0_i32_0 = arith.constant 0 : i32
    %c0_i32_1 = arith.constant 0 : i32
    return %arg0, %c0_i32, %c0_i32_0 : i32, i32, i32
  }
}

</mosaic_0001>

<llo_original>
// kernel: nmt_forward.1
$region0: #{nmt_forward.1}
  #allocation0 [shape = 'u32[]', space=smem, size = 0x4, offset = 0x4, fixed_abs, tag = 'smem constant byte address 0x4 - core index']
  #allocation1 [shape = 'u32[72,128]{1,0:T(1,128)}', space=vmem, size = 0x9000, scoped, tag = 'internal scratch']
  %s0 = inlined_call_operand.vmem [shape: f32[16,128], index: 0, kind: input, shape index: {}]
  %s1 = inlined_call_operand.vmem [shape: bf16[2048,128], index: 1, kind: input, shape index: {}]
  %s2 = inlined_call_operand.vmem [shape: bf16[128,128], index: 2, kind: input, shape index: {}]
  %s3 = inlined_call_operand.vmem [shape: bf16[128,128], index: 3, kind: input, shape index: {}]
  %s4 = inlined_call_operand.vmem [shape: f32[1,128], index: 4, kind: input, shape index: {}]
  %s5 = inlined_call_operand.vmem [shape: bf16[128,256], index: 5, kind: input, shape index: {}]
  %s6 = inlined_call_operand.vmem [shape: bf16[128,128], index: 6, kind: input, shape index: {}]
  %s7 = inlined_call_operand.vmem [shape: f32[1,128], index: 7, kind: input, shape index: {}]
  %s8 = inlined_call_operand.vmem [shape: f32[16,8,128], index: 8, kind: output, shape index: {0}]
  %s9 = inlined_call_operand.vmem [shape: f32[16,8,128], index: 9, kind: output, shape index: {1}]
  %10 = xla_tuple %s8, %s9
  %s11 = sld [smem:[#allocation0]]
  $region73: #{nmt_forward.1} parent=0
    _
  %s13 = ssub.s32 1, %s11
  %s14 = scalar_select 0, %s13, %s11
  loop: start=0, step=1, limit=4
  $region2: #{nmt_forward.1} parent=0 // loop_pre_header
    _
  $region3: #{nmt_forward.1} parent=0 // loop_header
    %s16 = sphi 0, %s20
    %p17 = scmp.ge.s32.totalorder %s16, 4
    %s26 = sphi 0, %s28
    %s29 = sphi 0, %s26
    %s30 = sphi 0, %s29
    %s46 = sphi 0, %s30
    %s52 = sphi 0, %s54
    %s55 = sphi 0, %s52
    %s56 = sphi 0, %s55
    %s72 = sphi 0, %s56
    %s78 = sphi 0, %s80
    %s81 = sphi 0, %s78
    %s82 = sphi 0, %s81
    %s98 = sphi 0, %s82
    %s102 = sphi 0, %s102
    %s104 = sphi 0, %s102
    %s105 = sphi 0, %s104
    %s119 = sphi 0, %s105
    %s123 = sphi 0, %s123
    %s125 = sphi 0, %s123
    %s126 = sphi 0, %s125
    %s140 = sphi 0, %s126
    %s144 = sphi 0, %s144
    %s146 = sphi 0, %s144
    %s147 = sphi 0, %s146
    %s161 = sphi 0, %s147
    %s165 = sphi 0, %s165
    %s167 = sphi 0, %s165
    %s168 = sphi 0, %s167
    %s182 = sphi 0, %s168
    %s186 = sphi 0, %s186
    %s188 = sphi 0, %s186
    %s189 = sphi 0, %s188
    %s203 = sphi 0, %s189
    %s209 = sphi 0, %s211
    %s212 = sphi 0, %s209
    %s213 = sphi 0, %s212
    %s229 = sphi 0, %s213
    %s235 = sphi 0, %s237
    %s238 = sphi 0, %s235
    %s239 = sphi 0, %s238
    %s255 = sphi 0, %s239
  $region4: #{nmt_forward.1} parent=0 // loop_header_branch
    %19 = sbr.rel (%p17) target = $region8
  $region5: #{nmt_forward.1} parent=0 // loop_body
    %s21 = ssub.s32 %s16, 1
    %s22 = ssub.s32 %s16, 2
    %s23 = sadd.s32 %s16, 1
    %s24 = ssub.s32 %s16, %s23
    %p25 = scmp.eq.s32.totalorder %s24, 0
    %s27 = sadd.s32 %s26, 1
    %s28 = scalar_select %p25, %s26, %s27
    %p31 = pneg %p25
    %p32 = scmp.eq.s32.totalorder %s16, 1
    %p33 = por %p31, %p32
    %p34 = scmp.ne.s32.totalorder %s26, %s29
    %p35 = scmp.eq.s32.totalorder %s16, 0
    %p36 = por %p34, %p35
    %p37 = scmp.ne.s32.totalorder %s26, %s29
    %p38 = scmp.eq.s32.totalorder %s21, 1
    %p39 = por %p37, %p38
    %p40 = scmp.ne.s32.totalorder %s29, %s30
    %p41 = scmp.eq.s32.totalorder %s21, 0
    %p42 = por %p40, %p41
    %p43 = scmp.ne.s32.totalorder %s29, %s30
    %p44 = scmp.eq.s32.totalorder %s22, 1
    %p45 = por %p43, %p44
    %p47 = scmp.ne.s32.totalorder %s30, %s46
    %p48 = scmp.eq.s32.totalorder %s22, 0
    %p49 = por %p47, %p48
    %s50 = ssub.s32 %s16, %s23
    %p51 = scmp.eq.s32.totalorder %s50, 0
    %s53 = sadd.s32 %s52, 1
    %s54 = scalar_select %p51, %s52, %s53
    %p57 = pneg %p51
    %p58 = scmp.eq.s32.totalorder %s16, 1
    %p59 = por %p57, %p58
    %p60 = scmp.ne.s32.totalorder %s52, %s55
    %p61 = scmp.eq.s32.totalorder %s16, 0
    %p62 = por %p60, %p61
    %p63 = scmp.ne.s32.totalorder %s52, %s55
    %p64 = scmp.eq.s32.totalorder %s21, 1
    %p65 = por %p63, %p64
    %p66 = scmp.ne.s32.totalorder %s55, %s56
    %p67 = scmp.eq.s32.totalorder %s21, 0
    %p68 = por %p66, %p67
    %p69 = scmp.ne.s32.totalorder %s55, %s56
    %p70 = scmp.eq.s32.totalorder %s22, 1
    %p71 = por %p69, %p70
    %p73 = scmp.ne.s32.totalorder %s56, %s72
    %p74 = scmp.eq.s32.totalorder %s22, 0
    %p75 = por %p73, %p74
    %s76 = ssub.s32 %s16, %s23
    %p77 = scmp.eq.s32.totalorder %s76, 0
    %s79 = sadd.s32 %s78, 1
    %s80 = scalar_select %p77, %s78, %s79
    %p83 = pneg %p77
    %p84 = scmp.eq.s32.totalorder %s16, 1
    %p85 = por %p83, %p84
    %p86 = scmp.ne.s32.totalorder %s78, %s81
    %p87 = scmp.eq.s32.totalorder %s16, 0
    %p88 = por %p86, %p87
    %p89 = scmp.ne.s32.totalorder %s78, %s81
    %p90 = scmp.eq.s32.totalorder %s21, 1
    %p91 = por %p89, %p90
    %p92 = scmp.ne.s32.totalorder %s81, %s82
    %p93 = scmp.eq.s32.totalorder %s21, 0
    %p94 = por %p92, %p93
    %p95 = scmp.ne.s32.totalorder %s81, %s82
    %p96 = scmp.eq.s32.totalorder %s22, 1
    %p97 = por %p95, %p96
    %p99 = scmp.ne.s32.totalorder %s82, %s98
    %p100 = scmp.eq.s32.totalorder %s22, 0
    %p101 = por %p99, %p100
    %s103 = sadd.s32 %s102, 1
    %p106 = scmp.eq.s32.totalorder %s16, 1
    %p107 = scmp.ne.s32.totalorder %s102, %s104
    %p108 = scmp.eq.s32.totalorder %s16, 0
    %p109 = por %p107, %p108
    %p110 = scmp.ne.s32.totalorder %s102, %s104
    %p111 = scmp.eq.s32.totalorder %s21, 1
    %p112 = por %p110, %p111
    %p113 = scmp.ne.s32.totalorder %s104, %s105
    %p114 = scmp.eq.s32.totalorder %s21, 0
    %p115 = por %p113, %p114
    %p116 = scmp.ne.s32.totalorder %s104, %s105
    %p117 = scmp.eq.s32.totalorder %s22, 1
    %p118 = por %p116, %p117
    %p120 = scmp.ne.s32.totalorder %s105, %s119
    %p121 = scmp.eq.s32.totalorder %s22, 0
    %p122 = por %p120, %p121
    %s124 = sadd.s32 %s123, 1
    %p127 = scmp.eq.s32.totalorder %s16, 1
    %p128 = scmp.ne.s32.totalorder %s123, %s125
    %p129 = scmp.eq.s32.totalorder %s16, 0
    %p130 = por %p128, %p129
    %p131 = scmp.ne.s32.totalorder %s123, %s125
    %p132 = scmp.eq.s32.totalorder %s21, 1
    %p133 = por %p131, %p132
    %p134 = scmp.ne.s32.totalorder %s125, %s126
    %p135 = scmp.eq.s32.totalorder %s21, 0
    %p136 = por %p134, %p135
    %p137 = scmp.ne.s32.totalorder %s125, %s126
    %p138 = scmp.eq.s32.totalorder %s22, 1
    %p139 = por %p137, %p138
    %p141 = scmp.ne.s32.totalorder %s126, %s140
    %p142 = scmp.eq.s32.totalorder %s22, 0
    %p143 = por %p141, %p142
    %s145 = sadd.s32 %s144, 1
    %p148 = scmp.eq.s32.totalorder %s16, 1
    %p149 = scmp.ne.s32.totalorder %s144, %s146
    %p150 = scmp.eq.s32.totalorder %s16, 0
    %p151 = por %p149, %p150
    %p152 = scmp.ne.s32.totalorder %s144, %s146
    %p153 = scmp.eq.s32.totalorder %s21, 1
    %p154 = por %p152, %p153
    %p155 = scmp.ne.s32.totalorder %s146, %s147
    %p156 = scmp.eq.s32.totalorder %s21, 0
    %p157 = por %p155, %p156
    %p158 = scmp.ne.s32.totalorder %s146, %s147
    %p159 = scmp.eq.s32.totalorder %s22, 1
    %p160 = por %p158, %p159
    %p162 = scmp.ne.s32.totalorder %s147, %s161
    %p163 = scmp.eq.s32.totalorder %s22, 0
    %p164 = por %p162, %p163
    %s166 = sadd.s32 %s165, 1
    %p169 = scmp.eq.s32.totalorder %s16, 1
    %p170 = scmp.ne.s32.totalorder %s165, %s167
    %p171 = scmp.eq.s32.totalorder %s16, 0
    %p172 = por %p170, %p171
    %p173 = scmp.ne.s32.totalorder %s165, %s167
    %p174 = scmp.eq.s32.totalorder %s21, 1
    %p175 = por %p173, %p174
    %p176 = scmp.ne.s32.totalorder %s167, %s168
    %p177 = scmp.eq.s32.totalorder %s21, 0
    %p178 = por %p176, %p177
    %p179 = scmp.ne.s32.totalorder %s167, %s168
    %p180 = scmp.eq.s32.totalorder %s22, 1
    %p181 = por %p179, %p180
    %p183 = scmp.ne.s32.totalorder %s168, %s182
    %p184 = scmp.eq.s32.totalorder %s22, 0
    %p185 = por %p183, %p184
    %s187 = sadd.s32 %s186, 1
    %p190 = scmp.eq.s32.totalorder %s16, 1
    %p191 = scmp.ne.s32.totalorder %s186, %s188
    %p192 = scmp.eq.s32.totalorder %s16, 0
    %p193 = por %p191, %p192
    %p194 = scmp.ne.s32.totalorder %s186, %s188
    %p195 = scmp.eq.s32.totalorder %s21, 1
    %p196 = por %p194, %p195
    %p197 = scmp.ne.s32.totalorder %s188, %s189
    %p198 = scmp.eq.s32.totalorder %s21, 0
    %p199 = por %p197, %p198
    %p200 = scmp.ne.s32.totalorder %s188, %s189
    %p201 = scmp.eq.s32.totalorder %s22, 1
    %p202 = por %p200, %p201
    %p204 = scmp.ne.s32.totalorder %s189, %s203
    %p205 = scmp.eq.s32.totalorder %s22, 0
    %p206 = por %p204, %p205
    %s207 = ssub.s32 %s16, %s23
    %p208 = scmp.eq.s32.totalorder %s207, 0
    %s210 = sadd.s32 %s209, 1
    %s211 = scalar_select %p208, %s209, %s210
    %p214 = pneg %p208
    %p215 = scmp.eq.s32.totalorder %s16, 1
    %p216 = por %p214, %p215
    %p217 = scmp.ne.s32.totalorder %s209, %s212
    %p218 = scmp.eq.s32.totalorder %s16, 0
    %p219 = por %p217, %p218
    %p220 = scmp.ne.s32.totalorder %s209, %s212
    %p221 = scmp.eq.s32.totalorder %s21, 1
    %p222 = por %p220, %p221
    %p223 = scmp.ne.s32.totalorder %s212, %s213
    %p224 = scmp.eq.s32.totalorder %s21, 0
    %p225 = por %p223, %p224
    %p226 = scmp.ne.s32.totalorder %s212, %s213
    %p227 = scmp.eq.s32.totalorder %s22, 1
    %p228 = por %p226, %p227
    %p230 = scmp.ne.s32.totalorder %s213, %s229
    %p231 = scmp.eq.s32.totalorder %s22, 0
    %p232 = por %p230, %p231
    %s233 = ssub.s32 %s16, %s23
    %p234 = scmp.eq.s32.totalorder %s233, 0
    %s236 = sadd.s32 %s235, 1
    %s237 = scalar_select %p234, %s235, %s236
    %p240 = pneg %p234
    %p241 = scmp.eq.s32.totalorder %s16, 1
    %p242 = por %p240, %p241
    %p243 = scmp.ne.s32.totalorder %s235, %s238
    %p244 = scmp.eq.s32.totalorder %s16, 0
    %p245 = por %p243, %p244
    %p246 = scmp.ne.s32.totalorder %s235, %s238
    %p247 = scmp.eq.s32.totalorder %s21, 1
    %p248 = por %p246, %p247
    %p249 = scmp.ne.s32.totalorder %s238, %s239
    %p250 = scmp.eq.s32.totalorder %s21, 0
    %p251 = por %p249, %p250
    %p252 = scmp.ne.s32.totalorder %s238, %s239
    %p253 = scmp.eq.s32.totalorder %s22, 1
    %p254 = por %p252, %p253
    %p256 = scmp.ne.s32.totalorder %s239, %s255
    %p257 = scmp.eq.s32.totalorder %s22, 0
    %p258 = por %p256, %p257
    %p259 = scmp.le.s32.totalorder 1, %s16
    %p260 = scmp.lt.s32.totalorder %s16, 3
    %p261 = pnand %p259, %p260
    %p262 = pneg %p261
    // Predicated region
    $region9: #{nmt_forward.1} parent=5 // pred_check
      _
    $region10: #{nmt_forward.1} parent=5 // pred_check_branch
      %264 = sbr.rel (%p261) target = $region12
    $region11: #{nmt_forward.1} parent=5 // pred_region
      %s265 = ssub.s32 %s16, 1
      // Predicated region
      $region13: #{nmt_forward.1} parent=11 // pred_check
        %p266 = pneg %p115
      $region14: #{nmt_forward.1} parent=11 // pred_check_branch
        %268 = sbr.rel (%p266) target = $region16
      $region15: #{nmt_forward.1} parent=11 // pred_region
        _
      $region16: #{nmt_forward.1} parent=11 // pred_fallthru
        _
      // Predicated region
      $region17: #{nmt_forward.1} parent=11 // pred_check
        %p269 = pneg %p136
      $region18: #{nmt_forward.1} parent=11 // pred_check_branch
        %271 = sbr.rel (%p269) target = $region20
      $region19: #{nmt_forward.1} parent=11 // pred_region
        _
      $region20: #{nmt_forward.1} parent=11 // pred_fallthru
        _
      // Predicated region
      $region21: #{nmt_forward.1} parent=11 // pred_check
        %p272 = pneg %p157
      $region22: #{nmt_forward.1} parent=11 // pred_check_branch
        %274 = sbr.rel (%p272) target = $region24
      $region23: #{nmt_forward.1} parent=11 // pred_region
        _
      $region24: #{nmt_forward.1} parent=11 // pred_fallthru
        _
      // Predicated region
      $region25: #{nmt_forward.1} parent=11 // pred_check
        %p275 = pneg %p178
      $region26: #{nmt_forward.1} parent=11 // pred_check_branch
        %277 = sbr.rel (%p275) target = $region28
      $region27: #{nmt_forward.1} parent=11 // pred_region
        _
      $region28: #{nmt_forward.1} parent=11 // pred_fallthru
        _
      // Predicated region
      $region29: #{nmt_forward.1} parent=11 // pred_check
        %p278 = pneg %p199
      $region30: #{nmt_forward.1} parent=11 // pred_check_branch
        %280 = sbr.rel (%p278) target = $region32
      $region31: #{nmt_forward.1} parent=11 // pred_region
        _
      $region32: #{nmt_forward.1} parent=11 // pred_fallthru
        _
    $region12: #{nmt_forward.1} parent=5 // pred_fallthru
      _
    %p281 = scmp.lt.s32.totalorder %s16, 2
    // Predicated region
    $region33: #{nmt_forward.1} parent=5 // pred_check
      %p282 = pneg %p281
    $region34: #{nmt_forward.1} parent=5 // pred_check_branch
      %284 = sbr.rel (%p282) target = $region36
    $region35: #{nmt_forward.1} parent=5 // pred_region
      // Predicated region
      $region37: #{nmt_forward.1} parent=35 // pred_check
        %p285 = pneg %p36
      $region38: #{nmt_forward.1} parent=35 // pred_check_branch
        %287 = sbr.rel (%p285) target = $region40
      $region39: #{nmt_forward.1} parent=35 // pred_region
        %p288 = scmp.lt.s32.totalorder %s16, 1
        %s289 = scalar_select %p288, %s16, 1
        %s290 = smul.addr %s289, 8
        %s291 = scalar_lea.vmem %s0, %s290
      $region40: #{nmt_forward.1} parent=35 // pred_fallthru
        _
      // Predicated region
      $region41: #{nmt_forward.1} parent=35 // pred_check
        %p292 = pneg %p62
      $region42: #{nmt_forward.1} parent=35 // pred_check_branch
        %294 = sbr.rel (%p292) target = $region44
      $region43: #{nmt_forward.1} parent=35 // pred_region
        %s295 = smul.u32 128, %s16
        %p296 = scmp.lt.s32.totalorder %s295, 255
        %s297 = scalar_select %p296, %s295, 255
        %s298 = smul.addr %s297, 4
        %s299 = scalar_lea.vmem %s1, %s298
        %s300 = smul.u32 128, %s16
      $region44: #{nmt_forward.1} parent=35 // pred_fallthru
        _
      // Predicated region
      $region45: #{nmt_forward.1} parent=35 // pred_check
        %p301 = pneg %p88
      $region46: #{nmt_forward.1} parent=35 // pred_check_branch
        %303 = sbr.rel (%p301) target = $region48
      $region47: #{nmt_forward.1} parent=35 // pred_region
        %s304 = smul.u32 8, %s16
        %p305 = scmp.lt.s32.totalorder %s304, 15
        %s306 = scalar_select %p305, %s304, 15
        %s307 = smul.addr %s306, 4
        %s308 = scalar_lea.vmem %s2, %s307
        %s309 = smul.u32 8, %s16
      $region48: #{nmt_forward.1} parent=35 // pred_fallthru
        _
    $region36: #{nmt_forward.1} parent=5 // pred_fallthru
      _
    %p310 = scmp.le.s32.totalorder 1, %s16
    %p311 = scmp.lt.s32.totalorder %s16, 3
    %p312 = pnand %p310, %p311
    %p313 = pneg %p312
    // Predicated region
    $region49: #{nmt_forward.1} parent=5 // pred_check
      _
    $region50: #{nmt_forward.1} parent=5 // pred_check_branch
      %315 = sbr.rel (%p312) target = $region52
    $region51: #{nmt_forward.1} parent=5 // pred_region
      %s316 = ssub.s32 %s16, 1
      %p317 = scmp.lt.s32.totalorder %s21, 1
      %s318 = scalar_select %p317, %s21, 1
      %s319 = smul.addr %s318, 8
      %s320 = scalar_lea.vmem %s0, %s319
      %p321 = pneg %p42
      %p322 = pneg %p39
      %s323 = smul.u32 128, %s21
      %p324 = scmp.lt.s32.totalorder %s323, 255
      %s325 = scalar_select %p324, %s323, 255
      %s326 = smul.addr %s325, 4
      %s327 = scalar_lea.vmem %s1, %s326
      %p328 = pneg %p68
      %p329 = pneg %p65
      %s330 = smul.u32 8, %s21
      %p331 = scmp.lt.s32.totalorder %s330, 15
      %s332 = scalar_select %p331, %s330, 15
      %s333 = smul.addr %s332, 4
      %s334 = scalar_lea.vmem %s2, %s333
      %p335 = pneg %p94
      %p336 = pneg %p91
      %p337 = pneg %p115
      %p338 = pneg %p112
      %p339 = pneg %p136
      %p340 = pneg %p133
      %p341 = pneg %p157
      %p342 = pneg %p154
      %p343 = pneg %p178
      %p344 = pneg %p175
      %p345 = pneg %p199
      %p346 = pneg %p196
      %p347 = pneg %p225
      %p348 = pneg %p222
      %s349 = smul.u32 8, %s21
      %p350 = scmp.lt.s32.totalorder %s349, 15
      %s351 = scalar_select %p350, %s349, 15
      %s352 = smul.addr %s351, 8
      %s353 = scalar_lea.vmem %s8, %s352
      %p354 = pneg %p251
      %p355 = pneg %p248
      %s356 = smul.u32 8, %s21
      %p357 = scmp.lt.s32.totalorder %s356, 15
      %s358 = scalar_select %p357, %s356, 15
      %s359 = smul.addr %s358, 8
      %s360 = scalar_lea.vmem %s9, %s359
      %p361 = scmp.lt.s32.totalorder %s21, 1
      %s362 = scalar_select %p361, %s21, 1
      %s363 = smul.addr %s362, 8
      %s364 = scalar_lea.vmem %s0, %s363
      %s365 = smul.u32 128, %s21
      %p366 = scmp.lt.s32.totalorder %s365, 255
      %s367 = scalar_select %p366, %s365, 255
      %s368 = smul.addr %s367, 4
      %s369 = scalar_lea.vmem %s1, %s368
      %s370 = smul.u32 128, %s21
      %s371 = smul.u32 8, %s21
      %p372 = scmp.lt.s32.totalorder %s371, 15
      %s373 = scalar_select %p372, %s371, 15
      %s374 = smul.addr %s373, 4
      %s375 = scalar_lea.vmem %s2, %s374
      %s376 = smul.u32 8, %s21
      %s377 = smul.u32 8, %s21
      %p378 = scmp.lt.s32.totalorder %s377, 15
      %s379 = scalar_select %p378, %s377, 15
      %s380 = smul.addr %s379, 8
      %s381 = scalar_lea.vmem %s8, %s380
      %s382 = smul.u32 8, %s21
      %s383 = smul.u32 8, %s21
      %p384 = scmp.lt.s32.totalorder %s383, 15
      %s385 = scalar_select %p384, %s383, 15
      %s386 = smul.addr %s385, 8
      %s387 = scalar_lea.vmem %s9, %s386
      %s388 = smul.u32 8, %s21
      %v389 = vld [vmem:[%s369] sm:$0xf]
      %v390 = vld [vmem:[%s369 + $0x4] sm:$0xf]
      %v391 = vld [vmem:[%s369 + $0x8] sm:$0xf]
      %v392 = vld [vmem:[%s369 + $0xc] sm:$0xf]
      %v393 = vld [vmem:[%s369 + $0x10] sm:$0xf]
      %v394 = vld [vmem:[%s369 + $0x14] sm:$0xf]
      %v395 = vld [vmem:[%s369 + $0x18] sm:$0xf]
      %v396 = vld [vmem:[%s369 + $0x1c] sm:$0xf]
      %v397 = vld [vmem:[%s369 + $0x20] sm:$0xf]
      %v398 = vld [vmem:[%s369 + $0x24] sm:$0xf]
      %v399 = vld [vmem:[%s369 + $0x28] sm:$0xf]
      %v400 = vld [vmem:[%s369 + $0x2c] sm:$0xf]
      %v401 = vld [vmem:[%s369 + $0x30] sm:$0xf]
      %v402 = vld [vmem:[%s369 + $0x34] sm:$0xf]
      %v403 = vld [vmem:[%s369 + $0x38] sm:$0xf]
      %v404 = vld [vmem:[%s369 + $0x3c] sm:$0xf]
      %v405 = vld [vmem:[%s369 + $0x40] sm:$0xf]
      %v406 = vld [vmem:[%s369 + $0x44] sm:$0xf]
      %v407 = vld [vmem:[%s369 + $0x48] sm:$0xf]
      %v408 = vld [vmem:[%s369 + $0x4c] sm:$0xf]
      %v409 = vld [vmem:[%s369 + $0x50] sm:$0xf]
      %v410 = vld [vmem:[%s369 + $0x54] sm:$0xf]
      %v411 = vld [vmem:[%s369 + $0x58] sm:$0xf]
      %v412 = vld [vmem:[%s369 + $0x5c] sm:$0xf]
      %v413 = vld [vmem:[%s369 + $0x60] sm:$0xf]
      %v414 = vld [vmem:[%s369 + $0x64] sm:$0xf]
      %v415 = vld [vmem:[%s369 + $0x68] sm:$0xf]
      %v416 = vld [vmem:[%s369 + $0x6c] sm:$0xf]
      %v417 = vld [vmem:[%s369 + $0x70] sm:$0xf]
      %v418 = vld [vmem:[%s369 + $0x74] sm:$0xf]
      %v419 = vld [vmem:[%s369 + $0x78] sm:$0xf]
      %v420 = vld [vmem:[%s369 + $0x7c] sm:$0xf]
      %v421 = vld [vmem:[%s369 + $0x80] sm:$0xf]
      %v422 = vld [vmem:[%s369 + $0x84] sm:$0xf]
      %v423 = vld [vmem:[%s369 + $0x88] sm:$0xf]
      %v424 = vld [vmem:[%s369 + $0x8c] sm:$0xf]
      %v425 = vld [vmem:[%s369 + $0x90] sm:$0xf]
      %v426 = vld [vmem:[%s369 + $0x94] sm:$0xf]
      %v427 = vld [vmem:[%s369 + $0x98] sm:$0xf]
      %v428 = vld [vmem:[%s369 + $0x9c] sm:$0xf]
      %v429 = vld [vmem:[%s369 + $0xa0] sm:$0xf]
      %v430 = vld [vmem:[%s369 + $0xa4] sm:$0xf]
      %v431 = vld [vmem:[%s369 + $0xa8] sm:$0xf]
      %v432 = vld [vmem:[%s369 + $0xac] sm:$0xf]
      %v433 = vld [vmem:[%s369 + $0xb0] sm:$0xf]
      %v434 = vld [vmem:[%s369 + $0xb4] sm:$0xf]
      %v435 = vld [vmem:[%s369 + $0xb8] sm:$0xf]
      %v436 = vld [vmem:[%s369 + $0xbc] sm:$0xf]
      %v437 = vld [vmem:[%s369 + $0xc0] sm:$0xf]
      %v438 = vld [vmem:[%s369 + $0xc4] sm:$0xf]
      %v439 = vld [vmem:[%s369 + $0xc8] sm:$0xf]
      %v440 = vld [vmem:[%s369 + $0xcc] sm:$0xf]
      %v441 = vld [vmem:[%s369 + $0xd0] sm:$0xf]
      %v442 = vld [vmem:[%s369 + $0xd4] sm:$0xf]
      %v443 = vld [vmem:[%s369 + $0xd8] sm:$0xf]
      %v444 = vld [vmem:[%s369 + $0xdc] sm:$0xf]
      %v445 = vld [vmem:[%s369 + $0xe0] sm:$0xf]
      %v446 = vld [vmem:[%s369 + $0xe4] sm:$0xf]
      %v447 = vld [vmem:[%s369 + $0xe8] sm:$0xf]
      %v448 = vld [vmem:[%s369 + $0xec] sm:$0xf]
      %v449 = vld [vmem:[%s369 + $0xf0] sm:$0xf]
      %v450 = vld [vmem:[%s369 + $0xf4] sm:$0xf]
      %v451 = vld [vmem:[%s369 + $0xf8] sm:$0xf]
      %v452 = vld [vmem:[%s369 + $0xfc] sm:$0xf]
      %v453 = vld [vmem:[%s369 + $0x100] sm:$0xf]
      %v454 = vld [vmem:[%s369 + $0x104] sm:$0xf]
      %v455 = vld [vmem:[%s369 + $0x108] sm:$0xf]
      %v456 = vld [vmem:[%s369 + $0x10c] sm:$0xf]
      %v457 = vld [vmem:[%s369 + $0x110] sm:$0xf]
      %v458 = vld [vmem:[%s369 + $0x114] sm:$0xf]
      %v459 = vld [vmem:[%s369 + $0x118] sm:$0xf]
      %v460 = vld [vmem:[%s369 + $0x11c] sm:$0xf]
      %v461 = vld [vmem:[%s369 + $0x120] sm:$0xf]
      %v462 = vld [vmem:[%s369 + $0x124] sm:$0xf]
      %v463 = vld [vmem:[%s369 + $0x128] sm:$0xf]
      %v464 = vld [vmem:[%s369 + $0x12c] sm:$0xf]
      %v465 = vld [vmem:[%s369 + $0x130] sm:$0xf]
      %v466 = vld [vmem:[%s369 + $0x134] sm:$0xf]
      %v467 = vld [vmem:[%s369 + $0x138] sm:$0xf]
      %v468 = vld [vmem:[%s369 + $0x13c] sm:$0xf]
      %v469 = vld [vmem:[%s369 + $0x140] sm:$0xf]
      %v470 = vld [vmem:[%s369 + $0x144] sm:$0xf]
      %v471 = vld [vmem:[%s369 + $0x148] sm:$0xf]
      %v472 = vld [vmem:[%s369 + $0x14c] sm:$0xf]
      %v473 = vld [vmem:[%s369 + $0x150] sm:$0xf]
      %v474 = vld [vmem:[%s369 + $0x154] sm:$0xf]
      %v475 = vld [vmem:[%s369 + $0x158] sm:$0xf]
      %v476 = vld [vmem:[%s369 + $0x15c] sm:$0xf]
      %v477 = vld [vmem:[%s369 + $0x160] sm:$0xf]
      %v478 = vld [vmem:[%s369 + $0x164] sm:$0xf]
      %v479 = vld [vmem:[%s369 + $0x168] sm:$0xf]
      %v480 = vld [vmem:[%s369 + $0x16c] sm:$0xf]
      %v481 = vld [vmem:[%s369 + $0x170] sm:$0xf]
      %v482 = vld [vmem:[%s369 + $0x174] sm:$0xf]
      %v483 = vld [vmem:[%s369 + $0x178] sm:$0xf]
      %v484 = vld [vmem:[%s369 + $0x17c] sm:$0xf]
      %v485 = vld [vmem:[%s369 + $0x180] sm:$0xf]
      %v486 = vld [vmem:[%s369 + $0x184] sm:$0xf]
      %v487 = vld [vmem:[%s369 + $0x188] sm:$0xf]
      %v488 = vld [vmem:[%s369 + $0x18c] sm:$0xf]
      %v489 = vld [vmem:[%s369 + $0x190] sm:$0xf]
      %v490 = vld [vmem:[%s369 + $0x194] sm:$0xf]
      %v491 = vld [vmem:[%s369 + $0x198] sm:$0xf]
      %v492 = vld [vmem:[%s369 + $0x19c] sm:$0xf]
      %v493 = vld [vmem:[%s369 + $0x1a0] sm:$0xf]
      %v494 = vld [vmem:[%s369 + $0x1a4] sm:$0xf]
      %v495 = vld [vmem:[%s369 + $0x1a8] sm:$0xf]
      %v496 = vld [vmem:[%s369 + $0x1ac] sm:$0xf]
      %v497 = vld [vmem:[%s369 + $0x1b0] sm:$0xf]
      %v498 = vld [vmem:[%s369 + $0x1b4] sm:$0xf]
      %v499 = vld [vmem:[%s369 + $0x1b8] sm:$0xf]
      %v500 = vld [vmem:[%s369 + $0x1bc] sm:$0xf]
      %v501 = vld [vmem:[%s369 + $0x1c0] sm:$0xf]
      %v502 = vld [vmem:[%s369 + $0x1c4] sm:$0xf]
      %v503 = vld [vmem:[%s369 + $0x1c8] sm:$0xf]
      %v504 = vld [vmem:[%s369 + $0x1cc] sm:$0xf]
      %v505 = vld [vmem:[%s369 + $0x1d0] sm:$0xf]
      %v506 = vld [vmem:[%s369 + $0x1d4] sm:$0xf]
      %v507 = vld [vmem:[%s369 + $0x1d8] sm:$0xf]
      %v508 = vld [vmem:[%s369 + $0x1dc] sm:$0xf]
      %v509 = vld [vmem:[%s369 + $0x1e0] sm:$0xf]
      %v510 = vld [vmem:[%s369 + $0x1e4] sm:$0xf]
      %v511 = vld [vmem:[%s369 + $0x1e8] sm:$0xf]
      %v512 = vld [vmem:[%s369 + $0x1ec] sm:$0xf]
      %v513 = vld [vmem:[%s369 + $0x1f0] sm:$0xf]
      %v514 = vld [vmem:[%s369 + $0x1f4] sm:$0xf]
      %v515 = vld [vmem:[%s369 + $0x1f8] sm:$0xf]
      %v516 = vld [vmem:[%s369 + $0x1fc] sm:$0xf]
      %v517 = vld [vmem:[%s3] sm:$0xf]
      %v518 = vld [vmem:[%s3 + $0x4] sm:$0xf]
      %v519 = vld [vmem:[%s3 + $0x8] sm:$0xf]
      %v520 = vld [vmem:[%s3 + $0xc] sm:$0xf]
      %v521 = vld [vmem:[%s3 + $0x10] sm:$0xf]
      %v522 = vld [vmem:[%s3 + $0x14] sm:$0xf]
      %v523 = vld [vmem:[%s3 + $0x18] sm:$0xf]
      %v524 = vld [vmem:[%s3 + $0x1c] sm:$0xf]
      %v525 = vld [vmem:[%s3 + $0x20] sm:$0xf]
      %v526 = vld [vmem:[%s3 + $0x24] sm:$0xf]
      %v527 = vld [vmem:[%s3 + $0x28] sm:$0xf]
      %v528 = vld [vmem:[%s3 + $0x2c] sm:$0xf]
      %v529 = vld [vmem:[%s3 + $0x30] sm:$0xf]
      %v530 = vld [vmem:[%s3 + $0x34] sm:$0xf]
      %v531 = vld [vmem:[%s3 + $0x38] sm:$0xf]
      %v532 = vld [vmem:[%s3 + $0x3c] sm:$0xf]
      %v533 = vld [vmem:[%s4] sm:$0x1]
      %v535 = vperm.slane %v533, 0
      %v665 = vunpack.c.l.b16 %v389
      %v666 = vunpack.c.l.b16 %v390
      %v667 = vunpack.c.l.b16 %v391
      %v668 = vunpack.c.l.b16 %v392
      %v669 = vunpack.c.l.b16 %v393
      %v670 = vunpack.c.l.b16 %v394
      %v671 = vunpack.c.l.b16 %v395
      %v672 = vunpack.c.l.b16 %v396
      %v673 = vunpack.c.l.b16 %v397
      %v674 = vunpack.c.l.b16 %v398
      %v675 = vunpack.c.l.b16 %v399
      %v676 = vunpack.c.l.b16 %v400
      %v677 = vunpack.c.l.b16 %v401
      %v678 = vunpack.c.l.b16 %v402
      %v679 = vunpack.c.l.b16 %v403
      %v680 = vunpack.c.l.b16 %v404
      %v681 = vunpack.c.l.b16 %v405
      %v682 = vunpack.c.l.b16 %v406
      %v683 = vunpack.c.l.b16 %v407
      %v684 = vunpack.c.l.b16 %v408
      %v685 = vunpack.c.l.b16 %v409
      %v686 = vunpack.c.l.b16 %v410
      %v687 = vunpack.c.l.b16 %v411
      %v688 = vunpack.c.l.b16 %v412
      %v689 = vunpack.c.l.b16 %v413
      %v690 = vunpack.c.l.b16 %v414
      %v691 = vunpack.c.l.b16 %v415
      %v692 = vunpack.c.l.b16 %v416
      %v693 = vunpack.c.l.b16 %v417
      %v694 = vunpack.c.l.b16 %v418
      %v695 = vunpack.c.l.b16 %v419
      %v696 = vunpack.c.l.b16 %v420
      %v697 = vunpack.c.l.b16 %v421
      %v698 = vunpack.c.l.b16 %v422
      %v699 = vunpack.c.l.b16 %v423
      %v700 = vunpack.c.l.b16 %v424
      %v701 = vunpack.c.l.b16 %v425
      %v702 = vunpack.c.l.b16 %v426
      %v703 = vunpack.c.l.b16 %v427
      %v704 = vunpack.c.l.b16 %v428
      %v705 = vunpack.c.l.b16 %v429
      %v706 = vunpack.c.l.b16 %v430
      %v707 = vunpack.c.l.b16 %v431
      %v708 = vunpack.c.l.b16 %v432
      %v709 = vunpack.c.l.b16 %v433
      %v710 = vunpack.c.l.b16 %v434
      %v711 = vunpack.c.l.b16 %v435
      %v712 = vunpack.c.l.b16 %v436
      %v713 = vunpack.c.l.b16 %v437
      %v714 = vunpack.c.l.b16 %v438
      %v715 = vunpack.c.l.b16 %v439
      %v716 = vunpack.c.l.b16 %v440
      %v717 = vunpack.c.l.b16 %v441
      %v718 = vunpack.c.l.b16 %v442
      %v719 = vunpack.c.l.b16 %v443
      %v720 = vunpack.c.l.b16 %v444
      %v721 = vunpack.c.l.b16 %v445
      %v722 = vunpack.c.l.b16 %v446
      %v723 = vunpack.c.l.b16 %v447
      %v724 = vunpack.c.l.b16 %v448
      %v725 = vunpack.c.l.b16 %v449
      %v726 = vunpack.c.l.b16 %v450
      %v727 = vunpack.c.l.b16 %v451
      %v728 = vunpack.c.l.b16 %v452
      %v729 = vunpack.c.l.b16 %v453
      %v730 = vunpack.c.l.b16 %v454
      %v731 = vunpack.c.l.b16 %v455
      %v732 = vunpack.c.l.b16 %v456
      %v733 = vunpack.c.l.b16 %v457
      %v734 = vunpack.c.l.b16 %v458
      %v735 = vunpack.c.l.b16 %v459
      %v736 = vunpack.c.l.b16 %v460
      %v737 = vunpack.c.l.b16 %v461
      %v738 = vunpack.c.l.b16 %v462
      %v739 = vunpack.c.l.b16 %v463
      %v740 = vunpack.c.l.b16 %v464
      %v741 = vunpack.c.l.b16 %v465
      %v742 = vunpack.c.l.b16 %v466
      %v743 = vunpack.c.l.b16 %v467
      %v744 = vunpack.c.l.b16 %v468
      %v745 = vunpack.c.l.b16 %v469
      %v746 = vunpack.c.l.b16 %v470
      %v747 = vunpack.c.l.b16 %v471
      %v748 = vunpack.c.l.b16 %v472
      %v749 = vunpack.c.l.b16 %v473
      %v750 = vunpack.c.l.b16 %v474
      %v751 = vunpack.c.l.b16 %v475
      %v752 = vunpack.c.l.b16 %v476
      %v753 = vunpack.c.l.b16 %v477
      %v754 = vunpack.c.l.b16 %v478
      %v755 = vunpack.c.l.b16 %v479
      %v756 = vunpack.c.l.b16 %v480
      %v757 = vunpack.c.l.b16 %v481
      %v758 = vunpack.c.l.b16 %v482
      %v759 = vunpack.c.l.b16 %v483
      %v760 = vunpack.c.l.b16 %v484
      %v761 = vunpack.c.l.b16 %v485
      %v762 = vunpack.c.l.b16 %v486
      %v763 = vunpack.c.l.b16 %v487
      %v764 = vunpack.c.l.b16 %v488
      %v765 = vunpack.c.l.b16 %v489
      %v766 = vunpack.c.l.b16 %v490
      %v767 = vunpack.c.l.b16 %v491
      %v768 = vunpack.c.l.b16 %v492
      %v769 = vunpack.c.l.b16 %v493
      %v770 = vunpack.c.l.b16 %v494
      %v771 = vunpack.c.l.b16 %v495
      %v772 = vunpack.c.l.b16 %v496
      %v773 = vunpack.c.l.b16 %v497
      %v774 = vunpack.c.l.b16 %v498
      %v775 = vunpack.c.l.b16 %v499
      %v776 = vunpack.c.l.b16 %v500
      %v777 = vunpack.c.l.b16 %v501
      %v778 = vunpack.c.l.b16 %v502
      %v779 = vunpack.c.l.b16 %v503
      %v780 = vunpack.c.l.b16 %v504
      %v781 = vunpack.c.l.b16 %v505
      %v782 = vunpack.c.l.b16 %v506
      %v783 = vunpack.c.l.b16 %v507
      %v784 = vunpack.c.l.b16 %v508
      %v785 = vunpack.c.l.b16 %v509
      %v786 = vunpack.c.l.b16 %v510
      %v787 = vunpack.c.l.b16 %v511
      %v788 = vunpack.c.l.b16 %v512
      %v789 = vunpack.c.l.b16 %v513
      %v790 = vunpack.c.l.b16 %v514
      %v791 = vunpack.c.l.b16 %v515
      %v792 = vunpack.c.l.b16 %v516
      %v793 = vpack.c.b16 %v666, %v665
      %v794 = vpack.c.b16 %v668, %v667
      %v795 = vpack.c.b16 %v670, %v669
      %v796 = vpack.c.b16 %v672, %v671
      %v797 = vpack.c.b16 %v674, %v673
      %v798 = vpack.c.b16 %v676, %v675
      %v799 = vpack.c.b16 %v678, %v677
      %v800 = vpack.c.b16 %v680, %v679
      %v801 = vpack.c.b16 %v682, %v681
      %v802 = vpack.c.b16 %v684, %v683
      %v803 = vpack.c.b16 %v686, %v685
      %v804 = vpack.c.b16 %v688, %v687
      %v805 = vpack.c.b16 %v690, %v689
      %v806 = vpack.c.b16 %v692, %v691
      %v807 = vpack.c.b16 %v694, %v693
      %v808 = vpack.c.b16 %v696, %v695
      %v809 = vpack.c.b16 %v698, %v697
      %v810 = vpack.c.b16 %v700, %v699
      %v811 = vpack.c.b16 %v702, %v701
      %v812 = vpack.c.b16 %v704, %v703
      %v813 = vpack.c.b16 %v706, %v705
      %v814 = vpack.c.b16 %v708, %v707
      %v815 = vpack.c.b16 %v710, %v709
      %v816 = vpack.c.b16 %v712, %v711
      %v817 = vpack.c.b16 %v714, %v713
      %v818 = vpack.c.b16 %v716, %v715
      %v819 = vpack.c.b16 %v718, %v717
      %v820 = vpack.c.b16 %v720, %v719
      %v821 = vpack.c.b16 %v722, %v721
      %v822 = vpack.c.b16 %v724, %v723
      %v823 = vpack.c.b16 %v726, %v725
      %v824 = vpack.c.b16 %v728, %v727
      %v825 = vpack.c.b16 %v730, %v729
      %v826 = vpack.c.b16 %v732, %v731
      %v827 = vpack.c.b16 %v734, %v733
      %v828 = vpack.c.b16 %v736, %v735
      %v829 = vpack.c.b16 %v738, %v737
      %v830 = vpack.c.b16 %v740, %v739
      %v831 = vpack.c.b16 %v742, %v741
      %v832 = vpack.c.b16 %v744, %v743
      %v833 = vpack.c.b16 %v746, %v745
      %v834 = vpack.c.b16 %v748, %v747
      %v835 = vpack.c.b16 %v750, %v749
      %v836 = vpack.c.b16 %v752, %v751
      %v837 = vpack.c.b16 %v754, %v753
      %v838 = vpack.c.b16 %v756, %v755
      %v839 = vpack.c.b16 %v758, %v757
      %v840 = vpack.c.b16 %v760, %v759
      %v841 = vpack.c.b16 %v762, %v761
      %v842 = vpack.c.b16 %v764, %v763
      %v843 = vpack.c.b16 %v766, %v765
      %v844 = vpack.c.b16 %v768, %v767
      %v845 = vpack.c.b16 %v770, %v769
      %v846 = vpack.c.b16 %v772, %v771
      %v847 = vpack.c.b16 %v774, %v773
      %v848 = vpack.c.b16 %v776, %v775
      %v849 = vpack.c.b16 %v778, %v777
      %v850 = vpack.c.b16 %v780, %v779
      %v851 = vpack.c.b16 %v782, %v781
      %v852 = vpack.c.b16 %v784, %v783
      %v853 = vpack.c.b16 %v786, %v785
      %v854 = vpack.c.b16 %v788, %v787
      %v855 = vpack.c.b16 %v790, %v789
      %v856 = vpack.c.b16 %v792, %v791
      %v937 = vunpack.c.l.b16 %v517
      %v938 = vunpack.c.l.b16 %v518
      %v939 = vunpack.c.l.b16 %v519
      %v940 = vunpack.c.l.b16 %v520
      %v941 = vunpack.c.l.b16 %v521
      %v942 = vunpack.c.l.b16 %v522
      %v943 = vunpack.c.l.b16 %v523
      %v944 = vunpack.c.l.b16 %v524
      %v945 = vunpack.c.l.b16 %v525
      %v946 = vunpack.c.l.b16 %v526
      %v947 = vunpack.c.l.b16 %v527
      %v948 = vunpack.c.l.b16 %v528
      %v949 = vunpack.c.l.b16 %v529
      %v950 = vunpack.c.l.b16 %v530
      %v951 = vunpack.c.l.b16 %v531
      %v952 = vunpack.c.l.b16 %v532
      %v953 = vpack.c.b16 %v938, %v937
      %v954 = vpack.c.b16 %v940, %v939
      %v955 = vpack.c.b16 %v942, %v941
      %v956 = vpack.c.b16 %v944, %v943
      %v957 = vpack.c.b16 %v946, %v945
      %v958 = vpack.c.b16 %v948, %v947
      %v959 = vpack.c.b16 %v950, %v949
      %v960 = vpack.c.b16 %v952, %v951
      %969 = vmatpush.bf16.msra.mxu0 %v960
      %970 = vmatpush.bf16.msra.mxu0 %v959
      %971 = vmatpush.bf16.msra.mxu0 %v958
      %972 = vmatpush.bf16.msra.mxu0 %v957
      %973 = vmatpush.bf16.msra.mxu0 %v956
      %974 = vmatpush.bf16.msra.mxu0 %v955
      %975 = vmatpush.bf16.msra.mxu0 %v954
      %976 = vmatpush.bf16.msra.mxu0 %v953
      %977 = vmatmul.bf16.gmra.mxu0 %v793
      %v978 = vpop.f32.mrf.mxu0
      %v979 = vadd.f32 %v535, %v978
      %v980 = vpop.f32.mrf.mxu0
      %v981 = vadd.f32 %v535, %v980
      %982 = vmatmul.bf16.gmra.mxu0 %v794
      %v983 = vpop.f32.mrf.mxu0
      %v984 = vadd.f32 %v535, %v983
      %v985 = vpop.f32.mrf.mxu0
      %v986 = vadd.f32 %v535, %v985
      %987 = vmatmul.bf16.gmra.mxu0 %v795
      %v988 = vpop.f32.mrf.mxu0
      %v989 = vadd.f32 %v535, %v988
      %v990 = vpop.f32.mrf.mxu0
      %v991 = vadd.f32 %v535, %v990
      %992 = vmatmul.bf16.gmra.mxu0 %v796
      %v993 = vpop.f32.mrf.mxu0
      %v994 = vadd.f32 %v535, %v993
      %v995 = vpop.f32.mrf.mxu0
      %v996 = vadd.f32 %v535, %v995
      %997 = vmatmul.bf16.gmra.mxu0 %v797
      %v998 = vpop.f32.mrf.mxu0
      %v999 = vadd.f32 %v535, %v998
      %v1000 = vpop.f32.mrf.mxu0
      %v1001 = vadd.f32 %v535, %v1000
      %1002 = vmatmul.bf16.gmra.mxu0 %v798
      %v1003 = vpop.f32.mrf.mxu0
      %v1004 = vadd.f32 %v535, %v1003
      %v1005 = vpop.f32.mrf.mxu0
      %v1006 = vadd.f32 %v535, %v1005
      %1007 = vmatmul.bf16.gmra.mxu0 %v799
      %v1008 = vpop.f32.mrf.mxu0
      %v1009 = vadd.f32 %v535, %v1008
      %v1010 = vpop.f32.mrf.mxu0
      %v1011 = vadd.f32 %v535, %v1010
      %1012 = vmatmul.bf16.gmra.mxu0 %v800
      %v1013 = vpop.f32.mrf.mxu0
      %v1014 = vadd.f32 %v535, %v1013
      %v1015 = vpop.f32.mrf.mxu0
      %v1016 = vadd.f32 %v535, %v1015
      %1017 = vmatmul.bf16.gmra.mxu0 %v801
      %v1018 = vpop.f32.mrf.mxu0
      %v1019 = vadd.f32 %v535, %v1018
      %v1020 = vpop.f32.mrf.mxu0
      %v1021 = vadd.f32 %v535, %v1020
      %1022 = vmatmul.bf16.gmra.mxu0 %v802
      %v1023 = vpop.f32.mrf.mxu0
      %v1024 = vadd.f32 %v535, %v1023
      %v1025 = vpop.f32.mrf.mxu0
      %v1026 = vadd.f32 %v535, %v1025
      %1027 = vmatmul.bf16.gmra.mxu0 %v803
      %v1028 = vpop.f32.mrf.mxu0
      %v1029 = vadd.f32 %v535, %v1028
      %v1030 = vpop.f32.mrf.mxu0
      %v1031 = vadd.f32 %v535, %v1030
      %1032 = vmatmul.bf16.gmra.mxu0 %v804
      %v1033 = vpop.f32.mrf.mxu0
      %v1034 = vadd.f32 %v535, %v1033
      %v1035 = vpop.f32.mrf.mxu0
      %v1036 = vadd.f32 %v535, %v1035
      %1037 = vmatmul.bf16.gmra.mxu0 %v805
      %v1038 = vpop.f32.mrf.mxu0
      %v1039 = vadd.f32 %v535, %v1038
      %v1040 = vpop.f32.mrf.mxu0
      %v1041 = vadd.f32 %v535, %v1040
      %1042 = vmatmul.bf16.gmra.mxu0 %v806
      %v1043 = vpop.f32.mrf.mxu0
      %v1044 = vadd.f32 %v535, %v1043
      %v1045 = vpop.f32.mrf.mxu0
      %v1046 = vadd.f32 %v535, %v1045
      %1047 = vmatmul.bf16.gmra.mxu0 %v807
      %v1048 = vpop.f32.mrf.mxu0
      %v1049 = vadd.f32 %v535, %v1048
      %v1050 = vpop.f32.mrf.mxu0
      %v1051 = vadd.f32 %v535, %v1050
      %1052 = vmatmul.bf16.gmra.mxu0 %v808
      %v1053 = vpop.f32.mrf.mxu0
      %v1054 = vadd.f32 %v535, %v1053
      %v1055 = vpop.f32.mrf.mxu0
      %v1056 = vadd.f32 %v535, %v1055
      %1057 = vmatmul.bf16.gmra.mxu0 %v809
      %v1058 = vpop.f32.mrf.mxu0
      %v1059 = vadd.f32 %v535, %v1058
      %v1060 = vpop.f32.mrf.mxu0
      %v1061 = vadd.f32 %v535, %v1060
      %1062 = vmatmul.bf16.gmra.mxu0 %v810
      %v1063 = vpop.f32.mrf.mxu0
      %v1064 = vadd.f32 %v535, %v1063
      %v1065 = vpop.f32.mrf.mxu0
      %v1066 = vadd.f32 %v535, %v1065
      %1067 = vmatmul.bf16.gmra.mxu0 %v811
      %v1068 = vpop.f32.mrf.mxu0
      %v1069 = vadd.f32 %v535, %v1068
      %v1070 = vpop.f32.mrf.mxu0
      %v1071 = vadd.f32 %v535, %v1070
      %1072 = vmatmul.bf16.gmra.mxu0 %v812
      %v1073 = vpop.f32.mrf.mxu0
      %v1074 = vadd.f32 %v535, %v1073
      %v1075 = vpop.f32.mrf.mxu0
      %v1076 = vadd.f32 %v535, %v1075
      %1077 = vmatmul.bf16.gmra.mxu0 %v813
      %v1078 = vpop.f32.mrf.mxu0
      %v1079 = vadd.f32 %v535, %v1078
      %v1080 = vpop.f32.mrf.mxu0
      %v1081 = vadd.f32 %v535, %v1080
      %1082 = vmatmul.bf16.gmra.mxu0 %v814
      %v1083 = vpop.f32.mrf.mxu0
      %v1084 = vadd.f32 %v535, %v1083
      %v1085 = vpop.f32.mrf.mxu0
      %v1086 = vadd.f32 %v535, %v1085
      %1087 = vmatmul.bf16.gmra.mxu0 %v815
      %v1088 = vpop.f32.mrf.mxu0
      %v1089 = vadd.f32 %v535, %v1088
      %v1090 = vpop.f32.mrf.mxu0
      %v1091 = vadd.f32 %v535, %v1090
      %1092 = vmatmul.bf16.gmra.mxu0 %v816
      %v1093 = vpop.f32.mrf.mxu0
      %v1094 = vadd.f32 %v535, %v1093
      %v1095 = vpop.f32.mrf.mxu0
      %v1096 = vadd.f32 %v535, %v1095
      %1097 = vmatmul.bf16.gmra.mxu0 %v817
      %v1098 = vpop.f32.mrf.mxu0
      %v1099 = vadd.f32 %v535, %v1098
      %v1100 = vpop.f32.mrf.mxu0
      %v1101 = vadd.f32 %v535, %v1100
      %1102 = vmatmul.bf16.gmra.mxu0 %v818
      %v1103 = vpop.f32.mrf.mxu0
      %v1104 = vadd.f32 %v535, %v1103
      %v1105 = vpop.f32.mrf.mxu0
      %v1106 = vadd.f32 %v535, %v1105
      %1107 = vmatmul.bf16.gmra.mxu0 %v819
      %v1108 = vpop.f32.mrf.mxu0
      %v1109 = vadd.f32 %v535, %v1108
      %v1110 = vpop.f32.mrf.mxu0
      %v1111 = vadd.f32 %v535, %v1110
      %1112 = vmatmul.bf16.gmra.mxu0 %v820
      %v1113 = vpop.f32.mrf.mxu0
      %v1114 = vadd.f32 %v535, %v1113
      %v1115 = vpop.f32.mrf.mxu0
      %v1116 = vadd.f32 %v535, %v1115
      %1117 = vmatmul.bf16.gmra.mxu0 %v821
      %v1118 = vpop.f32.mrf.mxu0
      %v1119 = vadd.f32 %v535, %v1118
      %v1120 = vpop.f32.mrf.mxu0
      %v1121 = vadd.f32 %v535, %v1120
      %1122 = vmatmul.bf16.gmra.mxu0 %v822
      %v1123 = vpop.f32.mrf.mxu0
      %v1124 = vadd.f32 %v535, %v1123
      %v1125 = vpop.f32.mrf.mxu0
      %v1126 = vadd.f32 %v535, %v1125
      %1127 = vmatmul.bf16.gmra.mxu0 %v823
      %v1128 = vpop.f32.mrf.mxu0
      %v1129 = vadd.f32 %v535, %v1128
      %v1130 = vpop.f32.mrf.mxu0
      %v1131 = vadd.f32 %v535, %v1130
      %1132 = vmatmul.bf16.gmra.mxu0 %v824
      %v1133 = vpop.f32.mrf.mxu0
      %v1134 = vadd.f32 %v535, %v1133
      %v1135 = vpop.f32.mrf.mxu0
      %v1136 = vadd.f32 %v535, %v1135
      %1137 = vmatmul.bf16.gmra.mxu0 %v825
      %v1138 = vpop.f32.mrf.mxu0
      %v1139 = vadd.f32 %v535, %v1138
      %v1140 = vpop.f32.mrf.mxu0
      %v1141 = vadd.f32 %v535, %v1140
      %1142 = vmatmul.bf16.gmra.mxu0 %v826
      %v1143 = vpop.f32.mrf.mxu0
      %v1144 = vadd.f32 %v535, %v1143
      %v1145 = vpop.f32.mrf.mxu0
      %v1146 = vadd.f32 %v535, %v1145
      %1147 = vmatmul.bf16.gmra.mxu0 %v827
      %v1148 = vpop.f32.mrf.mxu0
      %v1149 = vadd.f32 %v535, %v1148
      %v1150 = vpop.f32.mrf.mxu0
      %v1151 = vadd.f32 %v535, %v1150
      %1152 = vmatmul.bf16.gmra.mxu0 %v828
      %v1153 = vpop.f32.mrf.mxu0
      %v1154 = vadd.f32 %v535, %v1153
      %v1155 = vpop.f32.mrf.mxu0
      %v1156 = vadd.f32 %v535, %v1155
      %1157 = vmatmul.bf16.gmra.mxu0 %v829
      %v1158 = vpop.f32.mrf.mxu0
      %v1159 = vadd.f32 %v535, %v1158
      %v1160 = vpop.f32.mrf.mxu0
      %v1161 = vadd.f32 %v535, %v1160
      %1162 = vmatmul.bf16.gmra.mxu0 %v830
      %v1163 = vpop.f32.mrf.mxu0
      %v1164 = vadd.f32 %v535, %v1163
      %v1165 = vpop.f32.mrf.mxu0
      %v1166 = vadd.f32 %v535, %v1165
      %1167 = vmatmul.bf16.gmra.mxu0 %v831
      %v1168 = vpop.f32.mrf.mxu0
      %v1169 = vadd.f32 %v535, %v1168
      %v1170 = vpop.f32.mrf.mxu0
      %v1171 = vadd.f32 %v535, %v1170
      %1172 = vmatmul.bf16.gmra.mxu0 %v832
      %v1173 = vpop.f32.mrf.mxu0
      %v1174 = vadd.f32 %v535, %v1173
      %v1175 = vpop.f32.mrf.mxu0
      %v1176 = vadd.f32 %v535, %v1175
      %1177 = vmatmul.bf16.gmra.mxu0 %v833
      %v1178 = vpop.f32.mrf.mxu0
      %v1179 = vadd.f32 %v535, %v1178
      %v1180 = vpop.f32.mrf.mxu0
      %v1181 = vadd.f32 %v535, %v1180
      %1182 = vmatmul.bf16.gmra.mxu0 %v834
      %v1183 = vpop.f32.mrf.mxu0
      %v1184 = vadd.f32 %v535, %v1183
      %v1185 = vpop.f32.mrf.mxu0
      %v1186 = vadd.f32 %v535, %v1185
      %1187 = vmatmul.bf16.gmra.mxu0 %v835
      %v1188 = vpop.f32.mrf.mxu0
      %v1189 = vadd.f32 %v535, %v1188
      %v1190 = vpop.f32.mrf.mxu0
      %v1191 = vadd.f32 %v535, %v1190
      %1192 = vmatmul.bf16.gmra.mxu0 %v836
      %v1193 = vpop.f32.mrf.mxu0
      %v1194 = vadd.f32 %v535, %v1193
      %v1195 = vpop.f32.mrf.mxu0
      %v1196 = vadd.f32 %v535, %v1195
      %1197 = vmatmul.bf16.gmra.mxu0 %v837
      %v1198 = vpop.f32.mrf.mxu0
      %v1199 = vadd.f32 %v535, %v1198
      %v1200 = vpop.f32.mrf.mxu0
      %v1201 = vadd.f32 %v535, %v1200
      %1202 = vmatmul.bf16.gmra.mxu0 %v838
      %v1203 = vpop.f32.mrf.mxu0
      %v1204 = vadd.f32 %v535, %v1203
      %v1205 = vpop.f32.mrf.mxu0
      %v1206 = vadd.f32 %v535, %v1205
      %1207 = vmatmul.bf16.gmra.mxu0 %v839
      %v1208 = vpop.f32.mrf.mxu0
      %v1209 = vadd.f32 %v535, %v1208
      %v1210 = vpop.f32.mrf.mxu0
      %v1211 = vadd.f32 %v535, %v1210
      %1212 = vmatmul.bf16.gmra.mxu0 %v840
      %v1213 = vpop.f32.mrf.mxu0
      %v1214 = vadd.f32 %v535, %v1213
      %v1215 = vpop.f32.mrf.mxu0
      %v1216 = vadd.f32 %v535, %v1215
      %1217 = vmatmul.bf16.gmra.mxu0 %v841
      %v1218 = vpop.f32.mrf.mxu0
      %v1219 = vadd.f32 %v535, %v1218
      %v1220 = vpop.f32.mrf.mxu0
      %v1221 = vadd.f32 %v535, %v1220
      %1222 = vmatmul.bf16.gmra.mxu0 %v842
      %v1223 = vpop.f32.mrf.mxu0
      %v1224 = vadd.f32 %v535, %v1223
      %v1225 = vpop.f32.mrf.mxu0
      %v1226 = vadd.f32 %v535, %v1225
      %1227 = vmatmul.bf16.gmra.mxu0 %v843
      %v1228 = vpop.f32.mrf.mxu0
      %v1229 = vadd.f32 %v535, %v1228
      %v1230 = vpop.f32.mrf.mxu0
      %v1231 = vadd.f32 %v535, %v1230
      %1232 = vmatmul.bf16.gmra.mxu0 %v844
      %v1233 = vpop.f32.mrf.mxu0
      %v1234 = vadd.f32 %v535, %v1233
      %v1235 = vpop.f32.mrf.mxu0
      %v1236 = vadd.f32 %v535, %v1235
      %1237 = vmatmul.bf16.gmra.mxu0 %v845
      %v1238 = vpop.f32.mrf.mxu0
      %v1239 = vadd.f32 %v535, %v1238
      %v1240 = vpop.f32.mrf.mxu0
      %v1241 = vadd.f32 %v535, %v1240
      %1242 = vmatmul.bf16.gmra.mxu0 %v846
      %v1243 = vpop.f32.mrf.mxu0
      %v1244 = vadd.f32 %v535, %v1243
      %v1245 = vpop.f32.mrf.mxu0
      %v1246 = vadd.f32 %v535, %v1245
      %1247 = vmatmul.bf16.gmra.mxu0 %v847
      %v1248 = vpop.f32.mrf.mxu0
      %v1249 = vadd.f32 %v535, %v1248
      %v1250 = vpop.f32.mrf.mxu0
      %v1251 = vadd.f32 %v535, %v1250
      %1252 = vmatmul.bf16.gmra.mxu0 %v848
      %v1253 = vpop.f32.mrf.mxu0
      %v1254 = vadd.f32 %v535, %v1253
      %v1255 = vpop.f32.mrf.mxu0
      %v1256 = vadd.f32 %v535, %v1255
      %1257 = vmatmul.bf16.gmra.mxu0 %v849
      %v1258 = vpop.f32.mrf.mxu0
      %v1259 = vadd.f32 %v535, %v1258
      %v1260 = vpop.f32.mrf.mxu0
      %v1261 = vadd.f32 %v535, %v1260
      %1262 = vmatmul.bf16.gmra.mxu0 %v850
      %v1263 = vpop.f32.mrf.mxu0
      %v1264 = vadd.f32 %v535, %v1263
      %v1265 = vpop.f32.mrf.mxu0
      %v1266 = vadd.f32 %v535, %v1265
      %1267 = vmatmul.bf16.gmra.mxu0 %v851
      %v1268 = vpop.f32.mrf.mxu0
      %v1269 = vadd.f32 %v535, %v1268
      %v1270 = vpop.f32.mrf.mxu0
      %v1271 = vadd.f32 %v535, %v1270
      %1272 = vmatmul.bf16.gmra.mxu0 %v852
      %v1273 = vpop.f32.mrf.mxu0
      %v1274 = vadd.f32 %v535, %v1273
      %v1275 = vpop.f32.mrf.mxu0
      %v1276 = vadd.f32 %v535, %v1275
      %1277 = vmatmul.bf16.gmra.mxu0 %v853
      %v1278 = vpop.f32.mrf.mxu0
      %v1279 = vadd.f32 %v535, %v1278
      %v1280 = vpop.f32.mrf.mxu0
      %v1281 = vadd.f32 %v535, %v1280
      %1282 = vmatmul.bf16.gmra.mxu0 %v854
      %v1283 = vpop.f32.mrf.mxu0
      %v1284 = vadd.f32 %v535, %v1283
      %v1285 = vpop.f32.mrf.mxu0
      %v1286 = vadd.f32 %v535, %v1285
      %1287 = vmatmul.bf16.gmra.mxu0 %v855
      %v1288 = vpop.f32.mrf.mxu0
      %v1289 = vadd.f32 %v535, %v1288
      %v1290 = vpop.f32.mrf.mxu0
      %v1291 = vadd.f32 %v535, %v1290
      %1292 = vmatmul.bf16.gmra.mxu0 %v856
      %v1293 = vpop.f32.mrf.mxu0
      %v1294 = vadd.f32 %v535, %v1293
      %v1295 = vpop.f32.mrf.mxu0
      %v1296 = vadd.f32 %v535, %v1295
      %1297 = vdwg.mxu0
      %v1298 = vtanh.pop %v979
      %v1299 = vtanh.pop %v981
      %v1300 = vtanh.pop %v984
      %v1301 = vtanh.pop %v986
      %v1302 = vtanh.pop %v989
      %v1303 = vtanh.pop %v991
      %v1304 = vtanh.pop %v994
      %v1305 = vtanh.pop %v996
      %v1306 = vtanh.pop %v999
      %v1307 = vtanh.pop %v1001
      %v1308 = vtanh.pop %v1004
      %v1309 = vtanh.pop %v1006
      %v1310 = vtanh.pop %v1009
      %v1311 = vtanh.pop %v1011
      %v1312 = vtanh.pop %v1014
      %v1313 = vtanh.pop %v1016
      %v1314 = vtanh.pop %v1019
      %v1315 = vtanh.pop %v1021
      %v1316 = vtanh.pop %v1024
      %v1317 = vtanh.pop %v1026
      %v1318 = vtanh.pop %v1029
      %v1319 = vtanh.pop %v1031
      %v1320 = vtanh.pop %v1034
      %v1321 = vtanh.pop %v1036
      %v1322 = vtanh.pop %v1039
      %v1323 = vtanh.pop %v1041
      %v1324 = vtanh.pop %v1044
      %v1325 = vtanh.pop %v1046
      %v1326 = vtanh.pop %v1049
      %v1327 = vtanh.pop %v1051
      %v1328 = vtanh.pop %v1054
      %v1329 = vtanh.pop %v1056
      %v1330 = vtanh.pop %v1059
      %v1331 = vtanh.pop %v1061
      %v1332 = vtanh.pop %v1064
      %v1333 = vtanh.pop %v1066
      %v1334 = vtanh.pop %v1069
      %v1335 = vtanh.pop %v1071
      %v1336 = vtanh.pop %v1074
      %v1337 = vtanh.pop %v1076
      %v1338 = vtanh.pop %v1079
      %v1339 = vtanh.pop %v1081
      %v1340 = vtanh.pop %v1084
      %v1341 = vtanh.pop %v1086
      %v1342 = vtanh.pop %v1089
      %v1343 = vtanh.pop %v1091
      %v1344 = vtanh.pop %v1094
      %v1345 = vtanh.pop %v1096
      %v1346 = vtanh.pop %v1099
      %v1347 = vtanh.pop %v1101
      %v1348 = vtanh.pop %v1104
      %v1349 = vtanh.pop %v1106
      %v1350 = vtanh.pop %v1109
      %v1351 = vtanh.pop %v1111
      %v1352 = vtanh.pop %v1114
      %v1353 = vtanh.pop %v1116
      %v1354 = vtanh.pop %v1119
      %v1355 = vtanh.pop %v1121
      %v1356 = vtanh.pop %v1124
      %v1357 = vtanh.pop %v1126
      %v1358 = vtanh.pop %v1129
      %v1359 = vtanh.pop %v1131
      %v1360 = vtanh.pop %v1134
      %v1361 = vtanh.pop %v1136
      %v1362 = vtanh.pop %v1139
      %v1363 = vtanh.pop %v1141
      %v1364 = vtanh.pop %v1144
      %v1365 = vtanh.pop %v1146
      %v1366 = vtanh.pop %v1149
      %v1367 = vtanh.pop %v1151
      %v1368 = vtanh.pop %v1154
      %v1369 = vtanh.pop %v1156
      %v1370 = vtanh.pop %v1159
      %v1371 = vtanh.pop %v1161
      %v1372 = vtanh.pop %v1164
      %v1373 = vtanh.pop %v1166
      %v1374 = vtanh.pop %v1169
      %v1375 = vtanh.pop %v1171
      %v1376 = vtanh.pop %v1174
      %v1377 = vtanh.pop %v1176
      %v1378 = vtanh.pop %v1179
      %v1379 = vtanh.pop %v1181
      %v1380 = vtanh.pop %v1184
      %v1381 = vtanh.pop %v1186
      %v1382 = vtanh.pop %v1189
      %v1383 = vtanh.pop %v1191
      %v1384 = vtanh.pop %v1194
      %v1385 = vtanh.pop %v1196
      %v1386 = vtanh.pop %v1199
      %v1387 = vtanh.pop %v1201
      %v1388 = vtanh.pop %v1204
      %v1389 = vtanh.pop %v1206
      %v1390 = vtanh.pop %v1209
      %v1391 = vtanh.pop %v1211
      %v1392 = vtanh.pop %v1214
      %v1393 = vtanh.pop %v1216
      %v1394 = vtanh.pop %v1219
      %v1395 = vtanh.pop %v1221
      %v1396 = vtanh.pop %v1224
      %v1397 = vtanh.pop %v1226
      %v1398 = vtanh.pop %v1229
      %v1399 = vtanh.pop %v1231
      %v1400 = vtanh.pop %v1234
      %v1401 = vtanh.pop %v1236
      %v1402 = vtanh.pop %v1239
      %v1403 = vtanh.pop %v1241
      %v1404 = vtanh.pop %v1244
      %v1405 = vtanh.pop %v1246
      %v1406 = vtanh.pop %v1249
      %v1407 = vtanh.pop %v1251
      %v1408 = vtanh.pop %v1254
      %v1409 = vtanh.pop %v1256
      %v1410 = vtanh.pop %v1259
      %v1411 = vtanh.pop %v1261
      %v1412 = vtanh.pop %v1264
      %v1413 = vtanh.pop %v1266
      %v1414 = vtanh.pop %v1269
      %v1415 = vtanh.pop %v1271
      %v1416 = vtanh.pop %v1274
      %v1417 = vtanh.pop %v1276
      %v1418 = vtanh.pop %v1279
      %v1419 = vtanh.pop %v1281
      %v1420 = vtanh.pop %v1284
      %v1421 = vtanh.pop %v1286
      %v1422 = vtanh.pop %v1289
      %v1423 = vtanh.pop %v1291
      %v1424 = vtanh.pop %v1294
      %v1425 = vtanh.pop %v1296
      %v1426 = vpack.c.bf16 %v1298, %v1298
      %v1427 = vpack.c.bf16 %v1299, %v1299
      %v1428 = vpack.c.bf16 %v1300, %v1300
      %v1429 = vpack.c.bf16 %v1301, %v1301
      %v1430 = vpack.c.bf16 %v1302, %v1302
      %v1431 = vpack.c.bf16 %v1303, %v1303
      %v1432 = vpack.c.bf16 %v1304, %v1304
      %v1433 = vpack.c.bf16 %v1305, %v1305
      %v1434 = vpack.c.bf16 %v1306, %v1306
      %v1435 = vpack.c.bf16 %v1307, %v1307
      %v1436 = vpack.c.bf16 %v1308, %v1308
      %v1437 = vpack.c.bf16 %v1309, %v1309
      %v1438 = vpack.c.bf16 %v1310, %v1310
      %v1439 = vpack.c.bf16 %v1311, %v1311
      %v1440 = vpack.c.bf16 %v1312, %v1312
      %v1441 = vpack.c.bf16 %v1313, %v1313
      %v1442 = vpack.c.bf16 %v1314, %v1314
      %v1443 = vpack.c.bf16 %v1315, %v1315
      %v1444 = vpack.c.bf16 %v1316, %v1316
      %v1445 = vpack.c.bf16 %v1317, %v1317
      %v1446 = vpack.c.bf16 %v1318, %v1318
      %v1447 = vpack.c.bf16 %v1319, %v1319
      %v1448 = vpack.c.bf16 %v1320, %v1320
      %v1449 = vpack.c.bf16 %v1321, %v1321
      %v1450 = vpack.c.bf16 %v1322, %v1322
      %v1451 = vpack.c.bf16 %v1323, %v1323
      %v1452 = vpack.c.bf16 %v1324, %v1324
      %v1453 = vpack.c.bf16 %v1325, %v1325
      %v1454 = vpack.c.bf16 %v1326, %v1326
      %v1455 = vpack.c.bf16 %v1327, %v1327
      %v1456 = vpack.c.bf16 %v1328, %v1328
      %v1457 = vpack.c.bf16 %v1329, %v1329
      %v1458 = vpack.c.bf16 %v1330, %v1330
      %v1459 = vpack.c.bf16 %v1331, %v1331
      %v1460 = vpack.c.bf16 %v1332, %v1332
      %v1461 = vpack.c.bf16 %v1333, %v1333
      %v1462 = vpack.c.bf16 %v1334, %v1334
      %v1463 = vpack.c.bf16 %v1335, %v1335
      %v1464 = vpack.c.bf16 %v1336, %v1336
      %v1465 = vpack.c.bf16 %v1337, %v1337
      %v1466 = vpack.c.bf16 %v1338, %v1338
      %v1467 = vpack.c.bf16 %v1339, %v1339
      %v1468 = vpack.c.bf16 %v1340, %v1340
      %v1469 = vpack.c.bf16 %v1341, %v1341
      %v1470 = vpack.c.bf16 %v1342, %v1342
      %v1471 = vpack.c.bf16 %v1343, %v1343
      %v1472 = vpack.c.bf16 %v1344, %v1344
      %v1473 = vpack.c.bf16 %v1345, %v1345
      %v1474 = vpack.c.bf16 %v1346, %v1346
      %v1475 = vpack.c.bf16 %v1347, %v1347
      %v1476 = vpack.c.bf16 %v1348, %v1348
      %v1477 = vpack.c.bf16 %v1349, %v1349
      %v1478 = vpack.c.bf16 %v1350, %v1350
      %v1479 = vpack.c.bf16 %v1351, %v1351
      %v1480 = vpack.c.bf16 %v1352, %v1352
      %v1481 = vpack.c.bf16 %v1353, %v1353
      %v1482 = vpack.c.bf16 %v1354, %v1354
      %v1483 = vpack.c.bf16 %v1355, %v1355
      %v1484 = vpack.c.bf16 %v1356, %v1356
      %v1485 = vpack.c.bf16 %v1357, %v1357
      %v1486 = vpack.c.bf16 %v1358, %v1358
      %v1487 = vpack.c.bf16 %v1359, %v1359
      %v1488 = vpack.c.bf16 %v1360, %v1360
      %v1489 = vpack.c.bf16 %v1361, %v1361
      %v1490 = vpack.c.bf16 %v1362, %v1362
      %v1491 = vpack.c.bf16 %v1363, %v1363
      %v1492 = vpack.c.bf16 %v1364, %v1364
      %v1493 = vpack.c.bf16 %v1365, %v1365
      %v1494 = vpack.c.bf16 %v1366, %v1366
      %v1495 = vpack.c.bf16 %v1367, %v1367
      %v1496 = vpack.c.bf16 %v1368, %v1368
      %v1497 = vpack.c.bf16 %v1369, %v1369
      %v1498 = vpack.c.bf16 %v1370, %v1370
      %v1499 = vpack.c.bf16 %v1371, %v1371
      %v1500 = vpack.c.bf16 %v1372, %v1372
      %v1501 = vpack.c.bf16 %v1373, %v1373
      %v1502 = vpack.c.bf16 %v1374, %v1374
      %v1503 = vpack.c.bf16 %v1375, %v1375
      %v1504 = vpack.c.bf16 %v1376, %v1376
      %v1505 = vpack.c.bf16 %v1377, %v1377
      %v1506 = vpack.c.bf16 %v1378, %v1378
      %v1507 = vpack.c.bf16 %v1379, %v1379
      %v1508 = vpack.c.bf16 %v1380, %v1380
      %v1509 = vpack.c.bf16 %v1381, %v1381
      %v1510 = vpack.c.bf16 %v1382, %v1382
      %v1511 = vpack.c.bf16 %v1383, %v1383
      %v1512 = vpack.c.bf16 %v1384, %v1384
      %v1513 = vpack.c.bf16 %v1385, %v1385
      %v1514 = vpack.c.bf16 %v1386, %v1386
      %v1515 = vpack.c.bf16 %v1387, %v1387
      %v1516 = vpack.c.bf16 %v1388, %v1388
      %v1517 = vpack.c.bf16 %v1389, %v1389
      %v1518 = vpack.c.bf16 %v1390, %v1390
      %v1519 = vpack.c.bf16 %v1391, %v1391
      %v1520 = vpack.c.bf16 %v1392, %v1392
      %v1521 = vpack.c.bf16 %v1393, %v1393
      %v1522 = vpack.c.bf16 %v1394, %v1394
      %v1523 = vpack.c.bf16 %v1395, %v1395
      %v1524 = vpack.c.bf16 %v1396, %v1396
      %v1525 = vpack.c.bf16 %v1397, %v1397
      %v1526 = vpack.c.bf16 %v1398, %v1398
      %v1527 = vpack.c.bf16 %v1399, %v1399
      %v1528 = vpack.c.bf16 %v1400, %v1400
      %v1529 = vpack.c.bf16 %v1401, %v1401
      %v1530 = vpack.c.bf16 %v1402, %v1402
      %v1531 = vpack.c.bf16 %v1403, %v1403
      %v1532 = vpack.c.bf16 %v1404, %v1404
      %v1533 = vpack.c.bf16 %v1405, %v1405
      %v1534 = vpack.c.bf16 %v1406, %v1406
      %v1535 = vpack.c.bf16 %v1407, %v1407
      %v1536 = vpack.c.bf16 %v1408, %v1408
      %v1537 = vpack.c.bf16 %v1409, %v1409
      %v1538 = vpack.c.bf16 %v1410, %v1410
      %v1539 = vpack.c.bf16 %v1411, %v1411
      %v1540 = vpack.c.bf16 %v1412, %v1412
      %v1541 = vpack.c.bf16 %v1413, %v1413
      %v1542 = vpack.c.bf16 %v1414, %v1414
      %v1543 = vpack.c.bf16 %v1415, %v1415
      %v1544 = vpack.c.bf16 %v1416, %v1416
      %v1545 = vpack.c.bf16 %v1417, %v1417
      %v1546 = vpack.c.bf16 %v1418, %v1418
      %v1547 = vpack.c.bf16 %v1419, %v1419
      %v1548 = vpack.c.bf16 %v1420, %v1420
      %v1549 = vpack.c.bf16 %v1421, %v1421
      %v1550 = vpack.c.bf16 %v1422, %v1422
      %v1551 = vpack.c.bf16 %v1423, %v1423
      %v1552 = vpack.c.bf16 %v1424, %v1424
      %v1553 = vpack.c.bf16 %v1425, %v1425
      %v1554 = vld [vmem:[%s375] sm:$0xf]
      %v1555 = vld [vmem:[%s375 + $0x4] sm:$0xf]
      %v1556 = vld [vmem:[%s375 + $0x8] sm:$0xf]
      %v1557 = vld [vmem:[%s375 + $0xc] sm:$0xf]
      %v1558 = vld [vmem:[%s375 + $0x10] sm:$0xf]
      %v1559 = vld [vmem:[%s375 + $0x14] sm:$0xf]
      %v1560 = vld [vmem:[%s375 + $0x18] sm:$0xf]
      %v1561 = vld [vmem:[%s375 + $0x1c] sm:$0xf]
      %v1562 = vld [vmem:[%s5] sm:$0xff]
      %v1563 = vld [vmem:[%s5 + $0x8] sm:$0xff]
      %v1564 = vld [vmem:[%s5 + $0x10] sm:$0xff]
      %v1565 = vld [vmem:[%s5 + $0x18] sm:$0xff]
      %v1566 = vld [vmem:[%s5 + $0x20] sm:$0xff]
      %v1567 = vld [vmem:[%s5 + $0x28] sm:$0xff]
      %v1568 = vld [vmem:[%s5 + $0x30] sm:$0xff]
      %v1569 = vld [vmem:[%s5 + $0x38] sm:$0xff]
      %v1570 = vld [vmem:[%s5 + $0x40] sm:$0xff]
      %v1571 = vld [vmem:[%s5 + $0x48] sm:$0xff]
      %v1572 = vld [vmem:[%s5 + $0x50] sm:$0xff]
      %v1573 = vld [vmem:[%s5 + $0x58] sm:$0xff]
      %v1574 = vld [vmem:[%s5 + $0x60] sm:$0xff]
      %v1575 = vld [vmem:[%s5 + $0x68] sm:$0xff]
      %v1576 = vld [vmem:[%s5 + $0x70] sm:$0xff]
      %v1577 = vld [vmem:[%s5 + $0x78] sm:$0xff]
      %v1586 = vunpack.c.l.b16 %v1554
      %v1587 = vunpack.c.l.b16 %v1555
      %v1588 = vunpack.c.l.b16 %v1556
      %v1589 = vunpack.c.l.b16 %v1557
      %v1590 = vunpack.c.l.b16 %v1558
      %v1591 = vunpack.c.l.b16 %v1559
      %v1592 = vunpack.c.l.b16 %v1560
      %v1593 = vunpack.c.l.b16 %v1561
      %v1594 = vpack.c.b16 %v1587, %v1586
      %v1595 = vpack.c.b16 %v1589, %v1588
      %v1596 = vpack.c.b16 %v1591, %v1590
      %v1597 = vpack.c.b16 %v1593, %v1592
      %v1618 = vunpack.c.l.b16 %v1562
      %v1619 = vunpack.c.h.b16 %v1562
      %v1620 = vunpack.c.l.b16 %v1563
      %v1621 = vunpack.c.h.b16 %v1563
      %v1622 = vunpack.c.l.b16 %v1564
      %v1623 = vunpack.c.h.b16 %v1564
      %v1624 = vunpack.c.l.b16 %v1565
      %v1625 = vunpack.c.h.b16 %v1565
      %v1626 = vunpack.c.l.b16 %v1566
      %v1627 = vunpack.c.h.b16 %v1566
      %v1628 = vunpack.c.l.b16 %v1567
      %v1629 = vunpack.c.h.b16 %v1567
      %v1630 = vunpack.c.l.b16 %v1568
      %v1631 = vunpack.c.h.b16 %v1568
      %v1632 = vunpack.c.l.b16 %v1569
      %v1633 = vunpack.c.h.b16 %v1569
      %v1634 = vunpack.c.l.b16 %v1570
      %v1635 = vunpack.c.h.b16 %v1570
      %v1636 = vunpack.c.l.b16 %v1571
      %v1637 = vunpack.c.h.b16 %v1571
      %v1638 = vunpack.c.l.b16 %v1572
      %v1639 = vunpack.c.h.b16 %v1572
      %v1640 = vunpack.c.l.b16 %v1573
      %v1641 = vunpack.c.h.b16 %v1573
      %v1642 = vunpack.c.l.b16 %v1574
      %v1643 = vunpack.c.h.b16 %v1574
      %v1644 = vunpack.c.l.b16 %v1575
      %v1645 = vunpack.c.h.b16 %v1575
      %v1646 = vunpack.c.l.b16 %v1576
      %v1647 = vunpack.c.h.b16 %v1576
      %v1648 = vunpack.c.l.b16 %v1577
      %v1649 = vunpack.c.h.b16 %v1577
      %v1650 = vpack.c.b16 %v1620, %v1618
      %v1651 = vpack.c.b16 %v1621, %v1619
      %v1652 = vpack.c.b16 %v1624, %v1622
      %v1653 = vpack.c.b16 %v1625, %v1623
      %v1654 = vpack.c.b16 %v1628, %v1626
      %v1655 = vpack.c.b16 %v1629, %v1627
      %v1656 = vpack.c.b16 %v1632, %v1630
      %v1657 = vpack.c.b16 %v1633, %v1631
      %v1658 = vpack.c.b16 %v1636, %v1634
      %v1659 = vpack.c.b16 %v1637, %v1635
      %v1660 = vpack.c.b16 %v1640, %v1638
      %v1661 = vpack.c.b16 %v1641, %v1639
      %v1662 = vpack.c.b16 %v1644, %v1642
      %v1663 = vpack.c.b16 %v1645, %v1643
      %v1664 = vpack.c.b16 %v1648, %v1646
      %v1665 = vpack.c.b16 %v1649, %v1647
      %1682 = vmatpush.bf16.msra.mxu0 %v1664
      %1683 = vmatpush.bf16.msra.mxu0 %v1662
      %1684 = vmatpush.bf16.msra.mxu0 %v1660
      %1685 = vmatpush.bf16.msra.mxu0 %v1658
      %1686 = vmatpush.bf16.msra.mxu0 %v1656
      %1687 = vmatpush.bf16.msra.mxu0 %v1654
      %1688 = vmatpush.bf16.msra.mxu0 %v1652
      %1689 = vmatpush.bf16.msra.mxu0 %v1650
      %1690 = vmatmul.bf16.gmra.mxu0 %v1594
      %v1691 = vpop.f32.mrf.mxu0
      %v1692 = vadd.f32 0.0, %v1691
      %v1693 = vpop.f32.mrf.mxu0
      %v1694 = vadd.f32 0.0, %v1693
      %1695 = vmatmul.bf16.gmra.mxu0 %v1595
      %v1696 = vpop.f32.mrf.mxu0
      %v1697 = vadd.f32 0.0, %v1696
      %v1698 = vpop.f32.mrf.mxu0
      %v1699 = vadd.f32 0.0, %v1698
      %1700 = vmatmul.bf16.gmra.mxu0 %v1596
      %v1701 = vpop.f32.mrf.mxu0
      %v1702 = vadd.f32 0.0, %v1701
      %v1703 = vpop.f32.mrf.mxu0
      %v1704 = vadd.f32 0.0, %v1703
      %1705 = vmatmul.bf16.gmra.mxu0 %v1597
      %v1706 = vpop.f32.mrf.mxu0
      %v1707 = vadd.f32 0.0, %v1706
      %v1708 = vpop.f32.mrf.mxu0
      %v1709 = vadd.f32 0.0, %v1708
      %1710 = vdwg.mxu0
      %1711 = vmatpush.bf16.msra.mxu0 %v1665
      %1712 = vmatpush.bf16.msra.mxu0 %v1663
      %1713 = vmatpush.bf16.msra.mxu0 %v1661
      %1714 = vmatpush.bf16.msra.mxu0 %v1659
      %1715 = vmatpush.bf16.msra.mxu0 %v1657
      %1716 = vmatpush.bf16.msra.mxu0 %v1655
      %1717 = vmatpush.bf16.msra.mxu0 %v1653
      %1718 = vmatpush.bf16.msra.mxu0 %v1651
      %1719 = vmatmul.bf16.gmra.mxu0 %v1594
      %v1720 = vpop.f32.mrf.mxu0
      %v1721 = vadd.f32 0.0, %v1720
      %v1722 = vpop.f32.mrf.mxu0
      %v1723 = vadd.f32 0.0, %v1722
      %1724 = vmatmul.bf16.gmra.mxu0 %v1595
      %v1725 = vpop.f32.mrf.mxu0
      %v1726 = vadd.f32 0.0, %v1725
      %v1727 = vpop.f32.mrf.mxu0
      %v1728 = vadd.f32 0.0, %v1727
      %1729 = vmatmul.bf16.gmra.mxu0 %v1596
      %v1730 = vpop.f32.mrf.mxu0
      %v1731 = vadd.f32 0.0, %v1730
      %v1732 = vpop.f32.mrf.mxu0
      %v1733 = vadd.f32 0.0, %v1732
      %1734 = vmatmul.bf16.gmra.mxu0 %v1597
      %v1735 = vpop.f32.mrf.mxu0
      %v1736 = vadd.f32 0.0, %v1735
      %v1737 = vpop.f32.mrf.mxu0
      %v1738 = vadd.f32 0.0, %v1737
      %1739 = vdwg.mxu0
      %v1740 = vpack.c.bf16 %v1692, %v1692
      %v1741 = vpack.c.bf16 %v1694, %v1694
      %v1742 = vpack.c.bf16 %v1697, %v1697
      %v1743 = vpack.c.bf16 %v1699, %v1699
      %v1744 = vpack.c.bf16 %v1702, %v1702
      %v1745 = vpack.c.bf16 %v1704, %v1704
      %v1746 = vpack.c.bf16 %v1707, %v1707
      %v1747 = vpack.c.bf16 %v1709, %v1709
      %v1748 = vld [vmem:[%s364] sm:$0xff]
      %v1750 = vrot.slane %v1748, 1
      %v1751 = vrot.slane %v1748, 2
      %v1752 = vrot.slane %v1748, 3
      %v1753 = vrot.slane %v1748, 4
      %v1754 = vrot.slane %v1748, 5
      %v1755 = vrot.slane %v1748, 6
      %v1756 = vrot.slane %v1748, 7
      %v1757 = vperm.slane %v1748, 0
      %v1758 = vperm.slane %v1750, 0
      %v1759 = vperm.slane %v1751, 0
      %v1760 = vperm.slane %v1752, 0
      %v1761 = vperm.slane %v1753, 0
      %v1762 = vperm.slane %v1754, 0
      %v1763 = vperm.slane %v1755, 0
      %v1764 = vperm.slane %v1756, 0
      %v1789 = vunpack.c.l.b16 %v1426
      %v1790 = vunpack.c.l.b16 %v1427
      %v1791 = vunpack.c.l.b16 %v1428
      %v1792 = vunpack.c.l.b16 %v1429
      %v1793 = vunpack.c.l.b16 %v1430
      %v1794 = vunpack.c.l.b16 %v1431
      %v1795 = vunpack.c.l.b16 %v1432
      %v1796 = vunpack.c.l.b16 %v1433
      %v1797 = vunpack.c.l.b16 %v1434
      %v1798 = vunpack.c.l.b16 %v1435
      %v1799 = vunpack.c.l.b16 %v1436
      %v1800 = vunpack.c.l.b16 %v1437
      %v1801 = vunpack.c.l.b16 %v1438
      %v1802 = vunpack.c.l.b16 %v1439
      %v1803 = vunpack.c.l.b16 %v1440
      %v1804 = vunpack.c.l.b16 %v1441
      %v1805 = vpack.c.b16 %v1790, %v1789
      %v1806 = vpack.c.b16 %v1792, %v1791
      %v1807 = vpack.c.b16 %v1794, %v1793
      %v1808 = vpack.c.b16 %v1796, %v1795
      %v1809 = vpack.c.b16 %v1798, %v1797
      %v1810 = vpack.c.b16 %v1800, %v1799
      %v1811 = vpack.c.b16 %v1802, %v1801
      %v1812 = vpack.c.b16 %v1804, %v1803
      %1821 = vmatpush.bf16.xpose.msra.mxu0 %v1812
      %1822 = vmatpush.bf16.xpose.msra.mxu0 %v1811
      %1823 = vmatpush.bf16.xpose.msra.mxu0 %v1810
      %1824 = vmatpush.bf16.xpose.msra.mxu0 %v1809
      %1825 = vmatpush.bf16.xpose.msra.mxu0 %v1808
      %1826 = vmatpush.bf16.xpose.msra.mxu0 %v1807
      %1827 = vmatpush.bf16.xpose.msra.mxu0 %v1806
      %1828 = vmatpush.bf16.xpose.msra.mxu0 %v1805
      %1829 = vmatmul.bf16.gmra.mxu0 %v1740
      %v1830 = vpop.f32.mrf.mxu0
      %v1831 = vadd.f32 %v1757, %v1830
      %v1832 = vpop.f32.mrf.mxu0
      %1833 = vdwg.mxu0
      %v1850 = vunpack.c.l.b16 %v1442
      %v1851 = vunpack.c.l.b16 %v1443
      %v1852 = vunpack.c.l.b16 %v1444
      %v1853 = vunpack.c.l.b16 %v1445
      %v1854 = vunpack.c.l.b16 %v1446
      %v1855 = vunpack.c.l.b16 %v1447
      %v1856 = vunpack.c.l.b16 %v1448
      %v1857 = vunpack.c.l.b16 %v1449
      %v1858 = vunpack.c.l.b16 %v1450
      %v1859 = vunpack.c.l.b16 %v1451
      %v1860 = vunpack.c.l.b16 %v1452
      %v1861 = vunpack.c.l.b16 %v1453
      %v1862 = vunpack.c.l.b16 %v1454
      %v1863 = vunpack.c.l.b16 %v1455
      %v1864 = vunpack.c.l.b16 %v1456
      %v1865 = vunpack.c.l.b16 %v1457
      %v1866 = vpack.c.b16 %v1851, %v1850
      %v1867 = vpack.c.b16 %v1853, %v1852
      %v1868 = vpack.c.b16 %v1855, %v1854
      %v1869 = vpack.c.b16 %v1857, %v1856
      %v1870 = vpack.c.b16 %v1859, %v1858
      %v1871 = vpack.c.b16 %v1861, %v1860
      %v1872 = vpack.c.b16 %v1863, %v1862
      %v1873 = vpack.c.b16 %v1865, %v1864
      %1882 = vmatpush.bf16.xpose.msra.mxu0 %v1873
      %1883 = vmatpush.bf16.xpose.msra.mxu0 %v1872
      %1884 = vmatpush.bf16.xpose.msra.mxu0 %v1871
      %1885 = vmatpush.bf16.xpose.msra.mxu0 %v1870
      %1886 = vmatpush.bf16.xpose.msra.mxu0 %v1869
      %1887 = vmatpush.bf16.xpose.msra.mxu0 %v1868
      %1888 = vmatpush.bf16.xpose.msra.mxu0 %v1867
      %1889 = vmatpush.bf16.xpose.msra.mxu0 %v1866
      %1890 = vmatmul.bf16.gmra.mxu0 %v1741
      %v1891 = vpop.f32.mrf.mxu0
      %v1892 = vadd.f32 %v1758, %v1891
      %v1893 = vpop.f32.mrf.mxu0
      %1894 = vdwg.mxu0
      %v1911 = vunpack.c.l.b16 %v1458
      %v1912 = vunpack.c.l.b16 %v1459
      %v1913 = vunpack.c.l.b16 %v1460
      %v1914 = vunpack.c.l.b16 %v1461
      %v1915 = vunpack.c.l.b16 %v1462
      %v1916 = vunpack.c.l.b16 %v1463
      %v1917 = vunpack.c.l.b16 %v1464
      %v1918 = vunpack.c.l.b16 %v1465
      %v1919 = vunpack.c.l.b16 %v1466
      %v1920 = vunpack.c.l.b16 %v1467
      %v1921 = vunpack.c.l.b16 %v1468
      %v1922 = vunpack.c.l.b16 %v1469
      %v1923 = vunpack.c.l.b16 %v1470
      %v1924 = vunpack.c.l.b16 %v1471
      %v1925 = vunpack.c.l.b16 %v1472
      %v1926 = vunpack.c.l.b16 %v1473
      %v1927 = vpack.c.b16 %v1912, %v1911
      %v1928 = vpack.c.b16 %v1914, %v1913
      %v1929 = vpack.c.b16 %v1916, %v1915
      %v1930 = vpack.c.b16 %v1918, %v1917
      %v1931 = vpack.c.b16 %v1920, %v1919
      %v1932 = vpack.c.b16 %v1922, %v1921
      %v1933 = vpack.c.b16 %v1924, %v1923
      %v1934 = vpack.c.b16 %v1926, %v1925
      %1943 = vmatpush.bf16.xpose.msra.mxu0 %v1934
      %1944 = vmatpush.bf16.xpose.msra.mxu0 %v1933
      %1945 = vmatpush.bf16.xpose.msra.mxu0 %v1932
      %1946 = vmatpush.bf16.xpose.msra.mxu0 %v1931
      %1947 = vmatpush.bf16.xpose.msra.mxu0 %v1930
      %1948 = vmatpush.bf16.xpose.msra.mxu0 %v1929
      %1949 = vmatpush.bf16.xpose.msra.mxu0 %v1928
      %1950 = vmatpush.bf16.xpose.msra.mxu0 %v1927
      %1951 = vmatmul.bf16.gmra.mxu0 %v1742
      %v1952 = vpop.f32.mrf.mxu0
      %v1953 = vadd.f32 %v1759, %v1952
      %v1954 = vpop.f32.mrf.mxu0
      %1955 = vdwg.mxu0
      %v1972 = vunpack.c.l.b16 %v1474
      %v1973 = vunpack.c.l.b16 %v1475
      %v1974 = vunpack.c.l.b16 %v1476
      %v1975 = vunpack.c.l.b16 %v1477
      %v1976 = vunpack.c.l.b16 %v1478
      %v1977 = vunpack.c.l.b16 %v1479
      %v1978 = vunpack.c.l.b16 %v1480
      %v1979 = vunpack.c.l.b16 %v1481
      %v1980 = vunpack.c.l.b16 %v1482
      %v1981 = vunpack.c.l.b16 %v1483
      %v1982 = vunpack.c.l.b16 %v1484
      %v1983 = vunpack.c.l.b16 %v1485
      %v1984 = vunpack.c.l.b16 %v1486
      %v1985 = vunpack.c.l.b16 %v1487
      %v1986 = vunpack.c.l.b16 %v1488
      %v1987 = vunpack.c.l.b16 %v1489
      %v1988 = vpack.c.b16 %v1973, %v1972
      %v1989 = vpack.c.b16 %v1975, %v1974
      %v1990 = vpack.c.b16 %v1977, %v1976
      %v1991 = vpack.c.b16 %v1979, %v1978
      %v1992 = vpack.c.b16 %v1981, %v1980
      %v1993 = vpack.c.b16 %v1983, %v1982
      %v1994 = vpack.c.b16 %v1985, %v1984
      %v1995 = vpack.c.b16 %v1987, %v1986
      %2004 = vmatpush.bf16.xpose.msra.mxu0 %v1995
      %2005 = vmatpush.bf16.xpose.msra.mxu0 %v1994
      %2006 = vmatpush.bf16.xpose.msra.mxu0 %v1993
      %2007 = vmatpush.bf16.xpose.msra.mxu0 %v1992
      %2008 = vmatpush.bf16.xpose.msra.mxu0 %v1991
      %2009 = vmatpush.bf16.xpose.msra.mxu0 %v1990
      %2010 = vmatpush.bf16.xpose.msra.mxu0 %v1989
      %2011 = vmatpush.bf16.xpose.msra.mxu0 %v1988
      %2012 = vmatmul.bf16.gmra.mxu0 %v1743
      %v2013 = vpop.f32.mrf.mxu0
      %v2014 = vadd.f32 %v1760, %v2013
      %v2015 = vpop.f32.mrf.mxu0
      %2016 = vdwg.mxu0
      %v2033 = vunpack.c.l.b16 %v1490
      %v2034 = vunpack.c.l.b16 %v1491
      %v2035 = vunpack.c.l.b16 %v1492
      %v2036 = vunpack.c.l.b16 %v1493
      %v2037 = vunpack.c.l.b16 %v1494
      %v2038 = vunpack.c.l.b16 %v1495
      %v2039 = vunpack.c.l.b16 %v1496
      %v2040 = vunpack.c.l.b16 %v1497
      %v2041 = vunpack.c.l.b16 %v1498
      %v2042 = vunpack.c.l.b16 %v1499
      %v2043 = vunpack.c.l.b16 %v1500
      %v2044 = vunpack.c.l.b16 %v1501
      %v2045 = vunpack.c.l.b16 %v1502
      %v2046 = vunpack.c.l.b16 %v1503
      %v2047 = vunpack.c.l.b16 %v1504
      %v2048 = vunpack.c.l.b16 %v1505
      %v2049 = vpack.c.b16 %v2034, %v2033
      %v2050 = vpack.c.b16 %v2036, %v2035
      %v2051 = vpack.c.b16 %v2038, %v2037
      %v2052 = vpack.c.b16 %v2040, %v2039
      %v2053 = vpack.c.b16 %v2042, %v2041
      %v2054 = vpack.c.b16 %v2044, %v2043
      %v2055 = vpack.c.b16 %v2046, %v2045
      %v2056 = vpack.c.b16 %v2048, %v2047
      %2065 = vmatpush.bf16.xpose.msra.mxu0 %v2056
      %2066 = vmatpush.bf16.xpose.msra.mxu0 %v2055
      %2067 = vmatpush.bf16.xpose.msra.mxu0 %v2054
      %2068 = vmatpush.bf16.xpose.msra.mxu0 %v2053
      %2069 = vmatpush.bf16.xpose.msra.mxu0 %v2052
      %2070 = vmatpush.bf16.xpose.msra.mxu0 %v2051
      %2071 = vmatpush.bf16.xpose.msra.mxu0 %v2050
      %2072 = vmatpush.bf16.xpose.msra.mxu0 %v2049
      %2073 = vmatmul.bf16.gmra.mxu0 %v1744
      %v2074 = vpop.f32.mrf.mxu0
      %v2075 = vadd.f32 %v1761, %v2074
      %v2076 = vpop.f32.mrf.mxu0
      %2077 = vdwg.mxu0
      %v2094 = vunpack.c.l.b16 %v1506
      %v2095 = vunpack.c.l.b16 %v1507
      %v2096 = vunpack.c.l.b16 %v1508
      %v2097 = vunpack.c.l.b16 %v1509
      %v2098 = vunpack.c.l.b16 %v1510
      %v2099 = vunpack.c.l.b16 %v1511
      %v2100 = vunpack.c.l.b16 %v1512
      %v2101 = vunpack.c.l.b16 %v1513
      %v2102 = vunpack.c.l.b16 %v1514
      %v2103 = vunpack.c.l.b16 %v1515
      %v2104 = vunpack.c.l.b16 %v1516
      %v2105 = vunpack.c.l.b16 %v1517
      %v2106 = vunpack.c.l.b16 %v1518
      %v2107 = vunpack.c.l.b16 %v1519
      %v2108 = vunpack.c.l.b16 %v1520
      %v2109 = vunpack.c.l.b16 %v1521
      %v2110 = vpack.c.b16 %v2095, %v2094
      %v2111 = vpack.c.b16 %v2097, %v2096
      %v2112 = vpack.c.b16 %v2099, %v2098
      %v2113 = vpack.c.b16 %v2101, %v2100
      %v2114 = vpack.c.b16 %v2103, %v2102
      %v2115 = vpack.c.b16 %v2105, %v2104
      %v2116 = vpack.c.b16 %v2107, %v2106
      %v2117 = vpack.c.b16 %v2109, %v2108
      %2126 = vmatpush.bf16.xpose.msra.mxu0 %v2117
      %2127 = vmatpush.bf16.xpose.msra.mxu0 %v2116
      %2128 = vmatpush.bf16.xpose.msra.mxu0 %v2115
      %2129 = vmatpush.bf16.xpose.msra.mxu0 %v2114
      %2130 = vmatpush.bf16.xpose.msra.mxu0 %v2113
      %2131 = vmatpush.bf16.xpose.msra.mxu0 %v2112
      %2132 = vmatpush.bf16.xpose.msra.mxu0 %v2111
      %2133 = vmatpush.bf16.xpose.msra.mxu0 %v2110
      %2134 = vmatmul.bf16.gmra.mxu0 %v1745
      %v2135 = vpop.f32.mrf.mxu0
      %v2136 = vadd.f32 %v1762, %v2135
      %v2137 = vpop.f32.mrf.mxu0
      %2138 = vdwg.mxu0
      %v2155 = vunpack.c.l.b16 %v1522
      %v2156 = vunpack.c.l.b16 %v1523
      %v2157 = vunpack.c.l.b16 %v1524
      %v2158 = vunpack.c.l.b16 %v1525
      %v2159 = vunpack.c.l.b16 %v1526
      %v2160 = vunpack.c.l.b16 %v1527
      %v2161 = vunpack.c.l.b16 %v1528
      %v2162 = vunpack.c.l.b16 %v1529
      %v2163 = vunpack.c.l.b16 %v1530
      %v2164 = vunpack.c.l.b16 %v1531
      %v2165 = vunpack.c.l.b16 %v1532
      %v2166 = vunpack.c.l.b16 %v1533
      %v2167 = vunpack.c.l.b16 %v1534
      %v2168 = vunpack.c.l.b16 %v1535
      %v2169 = vunpack.c.l.b16 %v1536
      %v2170 = vunpack.c.l.b16 %v1537
      %v2171 = vpack.c.b16 %v2156, %v2155
      %v2172 = vpack.c.b16 %v2158, %v2157
      %v2173 = vpack.c.b16 %v2160, %v2159
      %v2174 = vpack.c.b16 %v2162, %v2161
      %v2175 = vpack.c.b16 %v2164, %v2163
      %v2176 = vpack.c.b16 %v2166, %v2165
      %v2177 = vpack.c.b16 %v2168, %v2167
      %v2178 = vpack.c.b16 %v2170, %v2169
      %2187 = vmatpush.bf16.xpose.msra.mxu0 %v2178
      %2188 = vmatpush.bf16.xpose.msra.mxu0 %v2177
      %2189 = vmatpush.bf16.xpose.msra.mxu0 %v2176
      %2190 = vmatpush.bf16.xpose.msra.mxu0 %v2175
      %2191 = vmatpush.bf16.xpose.msra.mxu0 %v2174
      %2192 = vmatpush.bf16.xpose.msra.mxu0 %v2173
      %2193 = vmatpush.bf16.xpose.msra.mxu0 %v2172
      %2194 = vmatpush.bf16.xpose.msra.mxu0 %v2171
      %2195 = vmatmul.bf16.gmra.mxu0 %v1746
      %v2196 = vpop.f32.mrf.mxu0
      %v2197 = vadd.f32 %v1763, %v2196
      %v2198 = vpop.f32.mrf.mxu0
      %2199 = vdwg.mxu0
      %v2216 = vunpack.c.l.b16 %v1538
      %v2217 = vunpack.c.l.b16 %v1539
      %v2218 = vunpack.c.l.b16 %v1540
      %v2219 = vunpack.c.l.b16 %v1541
      %v2220 = vunpack.c.l.b16 %v1542
      %v2221 = vunpack.c.l.b16 %v1543
      %v2222 = vunpack.c.l.b16 %v1544
      %v2223 = vunpack.c.l.b16 %v1545
      %v2224 = vunpack.c.l.b16 %v1546
      %v2225 = vunpack.c.l.b16 %v1547
      %v2226 = vunpack.c.l.b16 %v1548
      %v2227 = vunpack.c.l.b16 %v1549
      %v2228 = vunpack.c.l.b16 %v1550
      %v2229 = vunpack.c.l.b16 %v1551
      %v2230 = vunpack.c.l.b16 %v1552
      %v2231 = vunpack.c.l.b16 %v1553
      %v2232 = vpack.c.b16 %v2217, %v2216
      %v2233 = vpack.c.b16 %v2219, %v2218
      %v2234 = vpack.c.b16 %v2221, %v2220
      %v2235 = vpack.c.b16 %v2223, %v2222
      %v2236 = vpack.c.b16 %v2225, %v2224
      %v2237 = vpack.c.b16 %v2227, %v2226
      %v2238 = vpack.c.b16 %v2229, %v2228
      %v2239 = vpack.c.b16 %v2231, %v2230
      %2248 = vmatpush.bf16.xpose.msra.mxu0 %v2239
      %2249 = vmatpush.bf16.xpose.msra.mxu0 %v2238
      %2250 = vmatpush.bf16.xpose.msra.mxu0 %v2237
      %2251 = vmatpush.bf16.xpose.msra.mxu0 %v2236
      %2252 = vmatpush.bf16.xpose.msra.mxu0 %v2235
      %2253 = vmatpush.bf16.xpose.msra.mxu0 %v2234
      %2254 = vmatpush.bf16.xpose.msra.mxu0 %v2233
      %2255 = vmatpush.bf16.xpose.msra.mxu0 %v2232
      %2256 = vmatmul.bf16.gmra.mxu0 %v1747
      %v2257 = vpop.f32.mrf.mxu0
      %v2258 = vadd.f32 %v1764, %v2257
      %v2259 = vpop.f32.mrf.mxu0
      %2260 = vdwg.mxu0
      %2261 = vmax.xlane.f32.xlu0 %v1831
      %v2262 = vpop.xlane.xlu0 %2261
      %2263 = vmax.xlane.f32.xlu0 %v1892
      %v2264 = vpop.xlane.xlu0 %2263
      %2265 = vmax.xlane.f32.xlu0 %v1953
      %v2266 = vpop.xlane.xlu0 %2265
      %2267 = vmax.xlane.f32.xlu0 %v2014
      %v2268 = vpop.xlane.xlu0 %2267
      %2269 = vmax.xlane.f32.xlu0 %v2075
      %v2270 = vpop.xlane.xlu0 %2269
      %2271 = vmax.xlane.f32.xlu0 %v2136
      %v2272 = vpop.xlane.xlu0 %2271
      %2273 = vmax.xlane.f32.xlu0 %v2197
      %v2274 = vpop.xlane.xlu0 %2273
      %2275 = vmax.xlane.f32.xlu0 %v2258
      %v2276 = vpop.xlane.xlu0 %2275
      %v2277 = vsub.f32 %v1831, %v2262
      %v2278 = vsub.f32 %v1892, %v2264
      %v2279 = vsub.f32 %v1953, %v2266
      %v2280 = vsub.f32 %v2014, %v2268
      %v2281 = vsub.f32 %v2075, %v2270
      %v2282 = vsub.f32 %v2136, %v2272
      %v2283 = vsub.f32 %v2197, %v2274
      %v2284 = vsub.f32 %v2258, %v2276
      %v2285 = vmul.f32 %v2277, 1.442695
      %v2286 = vpow.pop %v2285
      %v2287 = vmul.f32 %v2278, 1.442695
      %v2288 = vpow.pop %v2287
      %v2289 = vmul.f32 %v2279, 1.442695
      %v2290 = vpow.pop %v2289
      %v2291 = vmul.f32 %v2280, 1.442695
      %v2292 = vpow.pop %v2291
      %v2293 = vmul.f32 %v2281, 1.442695
      %v2294 = vpow.pop %v2293
      %v2295 = vmul.f32 %v2282, 1.442695
      %v2296 = vpow.pop %v2295
      %v2297 = vmul.f32 %v2283, 1.442695
      %v2298 = vpow.pop %v2297
      %v2299 = vmul.f32 %v2284, 1.442695
      %v2300 = vpow.pop %v2299
      %2301 = vadd.xlane.f32.xlu0 %v2286
      %v2302 = vpop.xlane.xlu0 %2301
      %2303 = vadd.xlane.f32.xlu0 %v2288
      %v2304 = vpop.xlane.xlu0 %2303
      %2305 = vadd.xlane.f32.xlu0 %v2290
      %v2306 = vpop.xlane.xlu0 %2305
      %2307 = vadd.xlane.f32.xlu0 %v2292
      %v2308 = vpop.xlane.xlu0 %2307
      %2309 = vadd.xlane.f32.xlu0 %v2294
      %v2310 = vpop.xlane.xlu0 %2309
      %2311 = vadd.xlane.f32.xlu0 %v2296
      %v2312 = vpop.xlane.xlu0 %2311
      %2313 = vadd.xlane.f32.xlu0 %v2298
      %v2314 = vpop.xlane.xlu0 %2313
      %2315 = vadd.xlane.f32.xlu0 %v2300
      %v2316 = vpop.xlane.xlu0 %2315
      %v2317 = vrcp.pop %v2302
      %v2318 = vrcp.pop %v2304
      %v2319 = vrcp.pop %v2306
      %v2320 = vrcp.pop %v2308
      %v2321 = vrcp.pop %v2310
      %v2322 = vrcp.pop %v2312
      %v2323 = vrcp.pop %v2314
      %v2324 = vrcp.pop %v2316
      %v2325 = vmul.f32 %v2286, %v2317
      %v2326 = vmul.f32 %v2288, %v2318
      %v2327 = vmul.f32 %v2290, %v2319
      %v2328 = vmul.f32 %v2292, %v2320
      %v2329 = vmul.f32 %v2294, %v2321
      %v2330 = vmul.f32 %v2296, %v2322
      %v2331 = vmul.f32 %v2298, %v2323
      %v2332 = vmul.f32 %v2300, %v2324
      %v2333 = vpack.c.bf16 %v2325, %v2325
      %v2334 = vpack.c.bf16 %v2326, %v2326
      %v2335 = vpack.c.bf16 %v2327, %v2327
      %v2336 = vpack.c.bf16 %v2328, %v2328
      %v2337 = vpack.c.bf16 %v2329, %v2329
      %v2338 = vpack.c.bf16 %v2330, %v2330
      %v2339 = vpack.c.bf16 %v2331, %v2331
      %v2340 = vpack.c.bf16 %v2332, %v2332
      %2341 = vmatpush.bf16.msra.mxu0 %v1812
      %2342 = vmatpush.bf16.msra.mxu0 %v1811
      %2343 = vmatpush.bf16.msra.mxu0 %v1810
      %2344 = vmatpush.bf16.msra.mxu0 %v1809
      %2345 = vmatpush.bf16.msra.mxu0 %v1808
      %2346 = vmatpush.bf16.msra.mxu0 %v1807
      %2347 = vmatpush.bf16.msra.mxu0 %v1806
      %2348 = vmatpush.bf16.msra.mxu0 %v1805
      %2349 = vmatmul.bf16.gmra.mxu0 %v2333
      %v2350 = vpop.f32.mrf.mxu0
      %v2351 = vadd.f32 0.0, %v2350
      %v2352 = vpop.f32.mrf.mxu0
      %2353 = vdwg.mxu0
      %2354 = vmatpush.bf16.msra.mxu0 %v1873
      %2355 = vmatpush.bf16.msra.mxu0 %v1872
      %2356 = vmatpush.bf16.msra.mxu0 %v1871
      %2357 = vmatpush.bf16.msra.mxu0 %v1870
      %2358 = vmatpush.bf16.msra.mxu0 %v1869
      %2359 = vmatpush.bf16.msra.mxu0 %v1868
      %2360 = vmatpush.bf16.msra.mxu0 %v1867
      %2361 = vmatpush.bf16.msra.mxu0 %v1866
      %2362 = vmatmul.bf16.gmra.mxu0 %v2334
      %v2363 = vpop.f32.mrf.mxu0
      %v2364 = vadd.f32 0.0, %v2363
      %v2365 = vpop.f32.mrf.mxu0
      %2366 = vdwg.mxu0
      %2367 = vmatpush.bf16.msra.mxu0 %v1934
      %2368 = vmatpush.bf16.msra.mxu0 %v1933
      %2369 = vmatpush.bf16.msra.mxu0 %v1932
      %2370 = vmatpush.bf16.msra.mxu0 %v1931
      %2371 = vmatpush.bf16.msra.mxu0 %v1930
      %2372 = vmatpush.bf16.msra.mxu0 %v1929
      %2373 = vmatpush.bf16.msra.mxu0 %v1928
      %2374 = vmatpush.bf16.msra.mxu0 %v1927
      %2375 = vmatmul.bf16.gmra.mxu0 %v2335
      %v2376 = vpop.f32.mrf.mxu0
      %v2377 = vadd.f32 0.0, %v2376
      %v2378 = vpop.f32.mrf.mxu0
      %2379 = vdwg.mxu0
      %2380 = vmatpush.bf16.msra.mxu0 %v1995
      %2381 = vmatpush.bf16.msra.mxu0 %v1994
      %2382 = vmatpush.bf16.msra.mxu0 %v1993
      %2383 = vmatpush.bf16.msra.mxu0 %v1992
      %2384 = vmatpush.bf16.msra.mxu0 %v1991
      %2385 = vmatpush.bf16.msra.mxu0 %v1990
      %2386 = vmatpush.bf16.msra.mxu0 %v1989
      %2387 = vmatpush.bf16.msra.mxu0 %v1988
      %2388 = vmatmul.bf16.gmra.mxu0 %v2336
      %v2389 = vpop.f32.mrf.mxu0
      %v2390 = vadd.f32 0.0, %v2389
      %v2391 = vpop.f32.mrf.mxu0
      %2392 = vdwg.mxu0
      %2393 = vmatpush.bf16.msra.mxu0 %v2056
      %2394 = vmatpush.bf16.msra.mxu0 %v2055
      %2395 = vmatpush.bf16.msra.mxu0 %v2054
      %2396 = vmatpush.bf16.msra.mxu0 %v2053
      %2397 = vmatpush.bf16.msra.mxu0 %v2052
      %2398 = vmatpush.bf16.msra.mxu0 %v2051
      %2399 = vmatpush.bf16.msra.mxu0 %v2050
      %2400 = vmatpush.bf16.msra.mxu0 %v2049
      %2401 = vmatmul.bf16.gmra.mxu0 %v2337
      %v2402 = vpop.f32.mrf.mxu0
      %v2403 = vadd.f32 0.0, %v2402
      %v2404 = vpop.f32.mrf.mxu0
      %2405 = vdwg.mxu0
      %2406 = vmatpush.bf16.msra.mxu0 %v2117
      %2407 = vmatpush.bf16.msra.mxu0 %v2116
      %2408 = vmatpush.bf16.msra.mxu0 %v2115
      %2409 = vmatpush.bf16.msra.mxu0 %v2114
      %2410 = vmatpush.bf16.msra.mxu0 %v2113
      %2411 = vmatpush.bf16.msra.mxu0 %v2112
      %2412 = vmatpush.bf16.msra.mxu0 %v2111
      %2413 = vmatpush.bf16.msra.mxu0 %v2110
      %2414 = vmatmul.bf16.gmra.mxu0 %v2338
      %v2415 = vpop.f32.mrf.mxu0
      %v2416 = vadd.f32 0.0, %v2415
      %v2417 = vpop.f32.mrf.mxu0
      %2418 = vdwg.mxu0
      %2419 = vmatpush.bf16.msra.mxu0 %v2178
      %2420 = vmatpush.bf16.msra.mxu0 %v2177
      %2421 = vmatpush.bf16.msra.mxu0 %v2176
      %2422 = vmatpush.bf16.msra.mxu0 %v2175
      %2423 = vmatpush.bf16.msra.mxu0 %v2174
      %2424 = vmatpush.bf16.msra.mxu0 %v2173
      %2425 = vmatpush.bf16.msra.mxu0 %v2172
      %2426 = vmatpush.bf16.msra.mxu0 %v2171
      %2427 = vmatmul.bf16.gmra.mxu0 %v2339
      %v2428 = vpop.f32.mrf.mxu0
      %v2429 = vadd.f32 0.0, %v2428
      %v2430 = vpop.f32.mrf.mxu0
      %2431 = vdwg.mxu0
      %2432 = vmatpush.bf16.msra.mxu0 %v2239
      %2433 = vmatpush.bf16.msra.mxu0 %v2238
      %2434 = vmatpush.bf16.msra.mxu0 %v2237
      %2435 = vmatpush.bf16.msra.mxu0 %v2236
      %2436 = vmatpush.bf16.msra.mxu0 %v2235
      %2437 = vmatpush.bf16.msra.mxu0 %v2234
      %2438 = vmatpush.bf16.msra.mxu0 %v2233
      %2439 = vmatpush.bf16.msra.mxu0 %v2232
      %2440 = vmatmul.bf16.gmra.mxu0 %v2340
      %v2441 = vpop.f32.mrf.mxu0
      %v2442 = vadd.f32 0.0, %v2441
      %v2443 = vpop.f32.mrf.mxu0
      %2444 = vdwg.mxu0
      %v2445 = vpack.c.bf16 %v2364, %v2351
      %v2446 = vpack.c.bf16 %v2390, %v2377
      %v2447 = vpack.c.bf16 %v2416, %v2403
      %v2448 = vpack.c.bf16 %v2442, %v2429
      %v2449 = vld [vmem:[%s6] sm:$0xf]
      %v2450 = vld [vmem:[%s6 + $0x4] sm:$0xf]
      %v2451 = vld [vmem:[%s6 + $0x8] sm:$0xf]
      %v2452 = vld [vmem:[%s6 + $0xc] sm:$0xf]
      %v2453 = vld [vmem:[%s6 + $0x10] sm:$0xf]
      %v2454 = vld [vmem:[%s6 + $0x14] sm:$0xf]
      %v2455 = vld [vmem:[%s6 + $0x18] sm:$0xf]
      %v2456 = vld [vmem:[%s6 + $0x1c] sm:$0xf]
      %v2457 = vld [vmem:[%s6 + $0x20] sm:$0xf]
      %v2458 = vld [vmem:[%s6 + $0x24] sm:$0xf]
      %v2459 = vld [vmem:[%s6 + $0x28] sm:$0xf]
      %v2460 = vld [vmem:[%s6 + $0x2c] sm:$0xf]
      %v2461 = vld [vmem:[%s6 + $0x30] sm:$0xf]
      %v2462 = vld [vmem:[%s6 + $0x34] sm:$0xf]
      %v2463 = vld [vmem:[%s6 + $0x38] sm:$0xf]
      %v2464 = vld [vmem:[%s6 + $0x3c] sm:$0xf]
      %v2481 = vunpack.c.l.b16 %v2449
      %v2482 = vunpack.c.l.b16 %v2450
      %v2483 = vunpack.c.l.b16 %v2451
      %v2484 = vunpack.c.l.b16 %v2452
      %v2485 = vunpack.c.l.b16 %v2453
      %v2486 = vunpack.c.l.b16 %v2454
      %v2487 = vunpack.c.l.b16 %v2455
      %v2488 = vunpack.c.l.b16 %v2456
      %v2489 = vunpack.c.l.b16 %v2457
      %v2490 = vunpack.c.l.b16 %v2458
      %v2491 = vunpack.c.l.b16 %v2459
      %v2492 = vunpack.c.l.b16 %v2460
      %v2493 = vunpack.c.l.b16 %v2461
      %v2494 = vunpack.c.l.b16 %v2462
      %v2495 = vunpack.c.l.b16 %v2463
      %v2496 = vunpack.c.l.b16 %v2464
      %v2497 = vpack.c.b16 %v2482, %v2481
      %v2498 = vpack.c.b16 %v2484, %v2483
      %v2499 = vpack.c.b16 %v2486, %v2485
      %v2500 = vpack.c.b16 %v2488, %v2487
      %v2501 = vpack.c.b16 %v2490, %v2489
      %v2502 = vpack.c.b16 %v2492, %v2491
      %v2503 = vpack.c.b16 %v2494, %v2493
      %v2504 = vpack.c.b16 %v2496, %v2495
      %2513 = vmatpush.bf16.msra.mxu0 %v2504
      %2514 = vmatpush.bf16.msra.mxu0 %v2503
      %2515 = vmatpush.bf16.msra.mxu0 %v2502
      %2516 = vmatpush.bf16.msra.mxu0 %v2501
      %2517 = vmatpush.bf16.msra.mxu0 %v2500
      %2518 = vmatpush.bf16.msra.mxu0 %v2499
      %2519 = vmatpush.bf16.msra.mxu0 %v2498
      %2520 = vmatpush.bf16.msra.mxu0 %v2497
      %2521 = vmatmul.bf16.gmra.mxu0 %v2445
      %v2522 = vpop.f32.mrf.mxu0
      %v2523 = vadd.f32 0.0, %v2522
      %v2524 = vpop.f32.mrf.mxu0
      %v2525 = vadd.f32 0.0, %v2524
      %2526 = vmatmul.bf16.gmra.mxu0 %v2446
      %v2527 = vpop.f32.mrf.mxu0
      %v2528 = vadd.f32 0.0, %v2527
      %v2529 = vpop.f32.mrf.mxu0
      %v2530 = vadd.f32 0.0, %v2529
      %2531 = vmatmul.bf16.gmra.mxu0 %v2447
      %v2532 = vpop.f32.mrf.mxu0
      %v2533 = vadd.f32 0.0, %v2532
      %v2534 = vpop.f32.mrf.mxu0
      %v2535 = vadd.f32 0.0, %v2534
      %2536 = vmatmul.bf16.gmra.mxu0 %v2448
      %v2537 = vpop.f32.mrf.mxu0
      %v2538 = vadd.f32 0.0, %v2537
      %v2539 = vpop.f32.mrf.mxu0
      %v2540 = vadd.f32 0.0, %v2539
      %2541 = vdwg.mxu0
      %v2542 = vadd.f32 %v1721, %v2523
      %v2543 = vadd.f32 %v1723, %v2525
      %v2544 = vadd.f32 %v1726, %v2528
      %v2545 = vadd.f32 %v1728, %v2530
      %v2546 = vadd.f32 %v1731, %v2533
      %v2547 = vadd.f32 %v1733, %v2535
      %v2548 = vadd.f32 %v1736, %v2538
      %v2549 = vadd.f32 %v1738, %v2540
      %v2550 = vld [vmem:[%s7] sm:$0x1]
      %v2552 = vperm.slane %v2550, 0
      %v2554 = vadd.f32 %v2542, %v2552
      %v2555 = vadd.f32 %v2543, %v2552
      %v2556 = vadd.f32 %v2544, %v2552
      %v2557 = vadd.f32 %v2545, %v2552
      %v2558 = vadd.f32 %v2546, %v2552
      %v2559 = vadd.f32 %v2547, %v2552
      %v2560 = vadd.f32 %v2548, %v2552
      %v2561 = vadd.f32 %v2549, %v2552
      %v2562 = vtanh.pop %v2554
      %v2563 = vtanh.pop %v2555
      %v2564 = vtanh.pop %v2556
      %v2565 = vtanh.pop %v2557
      %v2566 = vtanh.pop %v2558
      %v2567 = vtanh.pop %v2559
      %v2568 = vtanh.pop %v2560
      %v2569 = vtanh.pop %v2561
      %2570 = vst [vmem:[%s381] sm:$0xff] %v2562
      %2571 = vst [vmem:[%s381 + $0x8] sm:$0xff] %v2563
      %2572 = vst [vmem:[%s381 + $0x10] sm:$0xff] %v2564
      %2573 = vst [vmem:[%s381 + $0x18] sm:$0xff] %v2565
      %2574 = vst [vmem:[%s381 + $0x20] sm:$0xff] %v2566
      %2575 = vst [vmem:[%s381 + $0x28] sm:$0xff] %v2567
      %2576 = vst [vmem:[%s381 + $0x30] sm:$0xff] %v2568
      %2577 = vst [vmem:[%s381 + $0x38] sm:$0xff] %v2569
      %2578 = vst [vmem:[%s387] sm:$0xff] %v2325
      %2579 = vst [vmem:[%s387 + $0x8] sm:$0xff] %v2326
      %2580 = vst [vmem:[%s387 + $0x10] sm:$0xff] %v2327
      %2581 = vst [vmem:[%s387 + $0x18] sm:$0xff] %v2328
      %2582 = vst [vmem:[%s387 + $0x20] sm:$0xff] %v2329
      %2583 = vst [vmem:[%s387 + $0x28] sm:$0xff] %v2330
      %2584 = vst [vmem:[%s387 + $0x30] sm:$0xff] %v2331
      %2585 = vst [vmem:[%s387 + $0x38] sm:$0xff] %v2332
      %s2586 = smul.u32 8, %s21
      %p2587 = scmp.lt.s32.totalorder %s2586, 15
      %s2588 = scalar_select %p2587, %s2586, 15
      %s2589 = smul.addr %s2588, 8
      %s2590 = scalar_lea.vmem %s8, %s2589
      %s2591 = smul.u32 8, %s21
      %p2592 = scmp.lt.s32.totalorder %s2591, 15
      %s2593 = scalar_select %p2592, %s2591, 15
      %s2594 = smul.addr %s2593, 8
      %s2595 = scalar_lea.vmem %s9, %s2594
      // Predicated region
      $region53: #{nmt_forward.1} parent=51 // pred_check
        %p2596 = pneg %p222
      $region54: #{nmt_forward.1} parent=51 // pred_check_branch
        %2598 = sbr.rel (%p2596) target = $region56
      $region55: #{nmt_forward.1} parent=51 // pred_region
        %s2599 = smul.u32 8, %s21
      $region56: #{nmt_forward.1} parent=51 // pred_fallthru
        _
      // Predicated region
      $region57: #{nmt_forward.1} parent=51 // pred_check
        %p2600 = pneg %p248
      $region58: #{nmt_forward.1} parent=51 // pred_check_branch
        %2602 = sbr.rel (%p2600) target = $region60
      $region59: #{nmt_forward.1} parent=51 // pred_region
        %s2603 = smul.u32 8, %s21
      $region60: #{nmt_forward.1} parent=51 // pred_fallthru
        _
    $region52: #{nmt_forward.1} parent=5 // pred_fallthru
      _
    %p2604 = scmp.le.s32.totalorder 2, %s16
    // Predicated region
    $region61: #{nmt_forward.1} parent=5 // pred_check
      %p2605 = pneg %p2604
    $region62: #{nmt_forward.1} parent=5 // pred_check_branch
      %2607 = sbr.rel (%p2605) target = $region64
    $region63: #{nmt_forward.1} parent=5 // pred_region
      %s2608 = ssub.s32 %s16, 2
      // Predicated region
      $region65: #{nmt_forward.1} parent=63 // pred_check
        %p2609 = pneg %p228
      $region66: #{nmt_forward.1} parent=63 // pred_check_branch
        %2611 = sbr.rel (%p2609) target = $region68
      $region67: #{nmt_forward.1} parent=63 // pred_region
        %s2612 = smul.u32 8, %s22
        %p2613 = scmp.lt.s32.totalorder %s2612, 15
        %s2614 = scalar_select %p2613, %s2612, 15
        %s2615 = smul.addr %s2614, 8
        %s2616 = scalar_lea.vmem %s8, %s2615
      $region68: #{nmt_forward.1} parent=63 // pred_fallthru
        _
      // Predicated region
      $region69: #{nmt_forward.1} parent=63 // pred_check
        %p2617 = pneg %p254
      $region70: #{nmt_forward.1} parent=63 // pred_check_branch
        %2619 = sbr.rel (%p2617) target = $region72
      $region71: #{nmt_forward.1} parent=63 // pred_region
        %s2620 = smul.u32 8, %s22
        %p2621 = scmp.lt.s32.totalorder %s2620, 15
        %s2622 = scalar_select %p2621, %s2620, 15
        %s2623 = smul.addr %s2622, 8
        %s2624 = scalar_lea.vmem %s9, %s2623
      $region72: #{nmt_forward.1} parent=63 // pred_fallthru
        _
    $region64: #{nmt_forward.1} parent=5 // pred_fallthru
      _
  $region6: #{nmt_forward.1} parent=0 // loop_footer
    %s20 = sadd.s32 1, %s16
  $region7: #{nmt_forward.1} parent=0 // loop_footer_branch
    %15 = sbr.rel target = $region3
  $region8: #{nmt_forward.1} parent=0 // loop_exit
    _

</llo_original>
